<compile_context>
chip_gen: v7x
topology: tpu7x:2x2x1
jax: 0.10.0
libtpu: 0.0.40
codegen_flags: <defaults>
</compile_context>

<pallas_src>
import functools

import jax
import jax.numpy as jnp
from jax.experimental import pallas as pl
from jax.experimental.pallas import tpu as pltpu


# ---------------------------------------------------------------------------
# Fused kernel: entire forward (all blocks, both streams) for BN samples.
# ---------------------------------------------------------------------------

def _fused_forward_kernel(x1_ref, x2_ref, mg_ref, bg_ref, mt_ref, bt_ref,
                          me_ref, be_ref, o1_ref, o2_ref, ypad_ref,
                          *, B, BN, T, VC, KT, PAD, OFF):
    """x1_ref/x2_ref : (BN, T, VC)        per-step activation slabs (lane dense)
       mg_ref        : (2, B, VC, VC)     bf16 folded spatial graph conv
       bg_ref        : (2, B, 1, VC)      f32  graph-mixed gcn bias
       mt_ref        : (2, B, KT*VC, VC)  bf16 temporal conv (im2col layout)
       bt_ref        : (2, B, 1, VC)      f32  temporal conv bias
       me_ref        : (2, B, VC, VC)     bf16 extra_info_residual 1x1 conv
       be_ref        : (2, B, 1, VC)      f32  extra_info_residual bias
       ypad_ref      : (BN, OFF+T+OFF, VC) f32 scratch, interior at row OFF
    """
    # Zero only the temporal-pad rows.  Interior rows are fully rewritten
    # before every read.  Done every grid step (cheap) because on v7x the
    # "parallel" grid axis shards steps across TensorCores, so a
    # program_id()==0 guard would leave the other core's scratch stale.
    if PAD > 0:
        zpad = jnp.zeros((BN, PAD, VC), jnp.float32)
        ypad_ref[:, OFF - PAD:OFF, :] = zpad
        ypad_ref[:, OFF + T:OFF + T + PAD, :] = zpad

    M = BN * T
    x = [x1_ref[...].reshape(M, VC), x2_ref[...].reshape(M, VC)]

    # TODO(synk): for realistic NUM_BLOCKS (~10) switch this static unroll to
    # lax.fori_loop with dynamic weight indexing to bound vreg live ranges.
    for b in range(B):                               # static unroll over blocks
        post = []
        for m in range(2):                           # static unroll over streams
            xin = x[m]
            # --- spatial graph conv (1x1 conv + A*importance mixing) + ReLU ---
            y = jnp.dot(xin.astype(jnp.bfloat16), mg_ref[m, b],
                        preferred_element_type=jnp.float32)
            y = jnp.maximum(y + bg_ref[m, b], 0.0)
            # --- temporal (KT x 1) conv with zero 'same' padding:
            #     aligned interior store, then im2col -> ONE K=KT*VC matmul ---
            ypad_ref[:, OFF:OFF + T, :] = y.reshape(BN, T, VC)
            xim = jnp.concatenate(
                [ypad_ref[:, OFF - PAD + d:OFF - PAD + d + T, :]
                 for d in range(KT)], axis=-1).reshape(M, KT * VC)
            z = jnp.dot(xim.astype(jnp.bfloat16), mt_ref[m, b],
                        preferred_element_type=jnp.float32) + bt_ref[m, b]
            # --- identity residual (C_in == C_out, stride 1) + ReLU ---
            post.append(jnp.maximum(z + xin, 0.0))

        # --- cross extra_info_residual: both residuals computed from the
        #     post-gcn values, then cross-added (matches the reference order) --
        r0 = jnp.dot(post[0].astype(jnp.bfloat16), me_ref[0, b],
                     preferred_element_type=jnp.float32) + be_ref[0, b]
        r1 = jnp.dot(post[1].astype(jnp.bfloat16), me_ref[1, b],
                     preferred_element_type=jnp.float32) + be_ref[1, b]
        x = [post[0] + r1, post[1] + r0]

    o1_ref[...] = x[0].reshape(BN, T, VC)
    o2_ref[...] = x[1].reshape(BN, T, VC)


# ---------------------------------------------------------------------------
# Weight folding (done once, plain jnp in the wrapper)
# ---------------------------------------------------------------------------

def _flatten_stream_params(A, blocks, V, C):
    """Fold each st_gcn block's weights into flattened (V*C, ...) matrices."""
    VC = V * C
    eyeV = jnp.eye(V, dtype=jnp.float32)
    Mg, bg, Mt, bt, Me, be = [], [], [], [], [], []
    for p in blocks:
        Aimp = A * p["imp"]                                             # (K, V, V)
        # out[(w,c')] = sum_{v,c} x[(v,c)] * sum_k Aimp[k,v,w] * Wg[k,c,c']
        Mg.append(jnp.einsum("kvw,kcd->vcwd", Aimp, p["wg"]).reshape(VC, VC))
        # conv bias applied before graph mixing -> mixed bias per output joint
        bg.append(jnp.einsum("kvw,kd->wd", Aimp, p["bg"][:, 0, :]).reshape(1, VC))
        # temporal conv acts per joint; im2col layout: rows ordered (tap, v, c)
        Mt.append(jnp.einsum("kcd,vw->kvcwd", p["wt"], eyeV).reshape(-1, VC))
        bt.append(jnp.broadcast_to(p["bt"], (V, C)).reshape(1, VC))
        # extra_info_residual 1x1 conv: kron(I_V, We)
        Me.append(jnp.einsum("vw,cd->vcwd", eyeV, p["we"]).reshape(VC, VC))
        be.append(jnp.broadcast_to(p["be"], (V, C)).reshape(1, VC))
    return tuple(jnp.stack(xs, axis=0) for xs in (Mg, bg, Mt, bt, Me, be))


# ---------------------------------------------------------------------------
# Forward wrapper
# ---------------------------------------------------------------------------

def combine_rev_forward(x1, x2, model1, model2):
    """CombineRevModel.forward.  x1, x2: (N, C, T, V) float32 (NCTV)."""
    N, C, T, V = x1.shape
    VC = V * C
    B = len(model1["blocks"])
    KT = model1["blocks"][0]["wt"].shape[0]
    PAD = (KT - 1) // 2
    OFF = 8                                  # sublane-aligned interior offset

    # NCTV -> lane-dense (N, T, V*C) slabs (the PyTorch permute/view prologue
    # is an identity and is not materialized).
    f1 = jnp.transpose(x1, (0, 2, 3, 1)).reshape(N, T, VC)
    f2 = jnp.transpose(x2, (0, 2, 3, 1)).reshape(N, T, VC)

    p1 = _flatten_stream_params(model1["A"], model1["blocks"], V, C)
    p2 = _flatten_stream_params(model2["A"], model2["blocks"], V, C)
    Mg, bg, Mt, bt, Me, be = (jnp.stack([a, b_], axis=0) for a, b_ in zip(p1, p2))
    # MXU operands in bf16 (f32 accumulation); biases / elementwise stay f32.
    Mg = Mg.astype(jnp.bfloat16)
    Mt = Mt.astype(jnp.bfloat16)
    Me = Me.astype(jnp.bfloat16)

    # Samples-per-step BN: fill the MXU M dimension (target BN*T >= 256) while
    # keeping >= 2 grid steps so the "parallel" axis shards both v7x TCs.
    bn = max(1, min(N, max(1, 256 // T)))
    grid = pl.cdiv(N, bn)
    if N >= 2:
        grid = max(grid, 2)
    bn = pl.cdiv(N, grid)
    NP = grid * bn
    if NP != N:                              # pad ragged tail with zero samples
        padw = ((0, NP - N), (0, 0), (0, 0))
        f1 = jnp.pad(f1, padw)
        f2 = jnp.pad(f2, padw)

    act_spec = pl.BlockSpec((bn, T, VC), lambda n: (n, 0, 0))

    def full(a):
        # Constant-index full-array resident (no re-DMA across grid steps).
        return pl.BlockSpec(a.shape, lambda n, _nd=a.ndim: (0,) * _nd)

    out1, out2 = pl.pallas_call(
        functools.partial(_fused_forward_kernel, B=B, BN=bn, T=T, VC=VC,
                          KT=KT, PAD=PAD, OFF=OFF),
        out_shape=(jax.ShapeDtypeStruct((NP, T, VC), jnp.float32),
                   jax.ShapeDtypeStruct((NP, T, VC), jnp.float32)),
        grid_spec=pltpu.PrefetchScalarGridSpec(
            num_scalar_prefetch=0,
            grid=(grid,),
            in_specs=[act_spec, act_spec,
                      full(Mg), full(bg), full(Mt), full(bt), full(Me), full(be)],
            out_specs=[act_spec, act_spec],
            scratch_shapes=[pltpu.VMEM((bn, OFF + T + OFF, VC), jnp.float32)],
        ),
        # "parallel" -> megacore-shardable on v7x (>= 2 steps by construction).
        compiler_params=pltpu.CompilerParams(
            dimension_semantics=("parallel",)),
    )(f1, f2, Mg, bg, Mt, bt, Me, be)

    y1 = jnp.transpose(out1[:N].reshape(N, T, V, C), (0, 3, 1, 2))  # back to NCTV
    y2 = jnp.transpose(out2[:N].reshape(N, T, V, C), (0, 3, 1, 2))
    return y1, y2


# ---------------------------------------------------------------------------
# Pure-JAX f32 reference (same folded-BN / 1x1 extra_info_residual semantics)
# ---------------------------------------------------------------------------

def _reference_forward(x1, x2, model1, model2):
    def st_gcn(x, A, p):                    # x: (N, T, V, C)
        _, T, _, _ = x.shape
        KT = p["wt"].shape[0]
        PAD = (KT - 1) // 2
        Aimp = A * p["imp"]
        xw = jnp.einsum("ntvc,kcd->nktvd", x, p["wg"]) + p["bg"][None, :, None, :, :]
        y = jnp.maximum(jnp.einsum("nktvd,kvw->ntwd", xw, Aimp), 0.0)
        ypad = jnp.pad(y, ((0, 0), (PAD, PAD), (0, 0), (0, 0)))
        z = jnp.zeros_like(y) + p["bt"][0]
        for d in range(KT):
            z = z + jnp.einsum("ntvc,cd->ntvd", ypad[:, d:d + T], p["wt"][d])
        return jnp.maximum(z + x, 0.0)

    def extra(x, p):
        return jnp.einsum("ntvc,cd->ntvd", x, p["we"]) + p["be"][0]

    a1 = jnp.transpose(x1, (0, 2, 3, 1))
    a2 = jnp.transpose(x2, (0, 2, 3, 1))
    for b1, b2 in zip(model1["blocks"], model2["blocks"]):
        a1 = st_gcn(a1, model1["A"], b1)
        a2 = st_gcn(a2, model2["A"], b2)
        r1, r2 = extra(a1, b1), extra(a2, b2)
        a1, a2 = a1 + r2, a2 + r1
    return (jnp.transpose(a1, (0, 3, 1, 2)), jnp.transpose(a2, (0, 3, 1, 2)))


# ---------------------------------------------------------------------------
# Deterministic synthetic parameters
# ---------------------------------------------------------------------------

def init_rev_model(key, num_blocks, C, V, K, KT):
    keys = jax.random.split(key, num_blocks + 1)
    A = jax.nn.softmax(jax.random.normal(keys[0], (K, V, V), jnp.float32), axis=-1)
    blocks = []
    for b in range(num_blocks):
        bk = jax.random.split(keys[b + 1], 7)
        blocks.append(dict(
            wg=0.2 * jax.random.normal(bk[0], (K, C, C), jnp.float32),   # gcn 1x1 conv
            bg=0.1 * jax.random.normal(bk[1], (K, 1, C), jnp.float32),   # gcn bias
            imp=1.0 + 0.1 * jax.random.normal(bk[2], (K, V, V), jnp.float32),  # edge_importance
            wt=0.2 * jax.random.normal(bk[3], (KT, C, C), jnp.float32),  # tcn conv
            bt=0.1 * jax.random.normal(bk[4], (1, C), jnp.float32),      # tcn bias
            we=0.2 * jax.random.normal(bk[5], (C, C), jnp.float32),      # extra_info_residual conv
            be=0.1 * jax.random.normal(bk[6], (1, C), jnp.float32),      # extra_info_residual bias
        ))
    return dict(A=A, blocks=blocks)


if __name__ == "__main__":
    # N, channels, time, joints (NCTV).  V*C = 128 -> lane-dense slabs.
    N, C, T, V = 2, 8, 16, 16
    K, KT, NUM_BLOCKS = 3, 3, 2

    key = jax.random.PRNGKey(0)
    k_x1, k_x2, k_m1, k_m2 = jax.random.split(key, 4)
    x1 = jax.random.normal(k_x1, (N, C, T, V), jnp.float32)
    x2 = jax.random.normal(k_x2, (N, C, T, V), jnp.float32)

    model1 = init_rev_model(k_m1, NUM_BLOCKS, C, V, K, KT)
    model2 = init_rev_model(k_m2, NUM_BLOCKS, C, V, K, KT)

    fwd = jax.jit(combine_rev_forward)
    y1, y2 = fwd(x1, x2, model1, model2)
    jax.block_until_ready((y1, y2))

    r1, r2 = _reference_forward(x1, x2, model1, model2)
    assert y1.shape == (N, C, T, V) and y2.shape == (N, C, T, V)
    assert bool(jnp.all(jnp.isfinite(y1))) and bool(jnp.all(jnp.isfinite(y2)))
    assert bool(jnp.allclose(y1, r1, rtol=5e-2, atol=5e-2)), float(jnp.max(jnp.abs(y1 - r1)))
    assert bool(jnp.allclose(y2, r2, rtol=5e-2, atol=5e-2)), float(jnp.max(jnp.abs(y2 - r2)))
    print("KERNEL_OK")
</pallas_src>

<mosaic_0001>
module attributes {stable_mosaic.version = 11 : i64} {
  func.func @_fused_forward_kernel(%arg0: i32, %arg1: memref<1x16x128xf32, #tpu.memory_space<vmem>>, %arg2: memref<1x16x128xf32, #tpu.memory_space<vmem>>, %arg3: memref<2x2x128x128xbf16, #tpu.memory_space<vmem>>, %arg4: memref<2x2x1x128xf32, #tpu.memory_space<vmem>>, %arg5: memref<2x2x384x128xbf16, #tpu.memory_space<vmem>>, %arg6: memref<2x2x1x128xf32, #tpu.memory_space<vmem>>, %arg7: memref<2x2x128x128xbf16, #tpu.memory_space<vmem>>, %arg8: memref<2x2x1x128xf32, #tpu.memory_space<vmem>>, %arg9: memref<1x16x128xf32, #tpu.memory_space<vmem>>, %arg10: memref<1x16x128xf32, #tpu.memory_space<vmem>>, %arg11: memref<1x32x128xf32, #tpu.memory_space<vmem>>) attributes {dimension_semantics = [#tpu.dimension_semantics<parallel>], iteration_bounds = array<i64: 2>, scalar_prefetch = 0 : i64, scratch_operands = 1 : i64, tpu.core_type = #tpu.core_type<tc>, window_params = [{transform_indices = @transform_0, window_bounds = array<i64: 1, 16, 128>}, {transform_indices = @transform_1, window_bounds = array<i64: 1, 16, 128>}, {pipeline_mode = #tpu.pipeline_mode<synchronous>, transform_indices = @transform_2, window_bounds = array<i64: 2, 2, 128, 128>}, {pipeline_mode = #tpu.pipeline_mode<synchronous>, transform_indices = @transform_3, window_bounds = array<i64: 2, 2, 1, 128>}, {pipeline_mode = #tpu.pipeline_mode<synchronous>, transform_indices = @transform_4, window_bounds = array<i64: 2, 2, 384, 128>}, {pipeline_mode = #tpu.pipeline_mode<synchronous>, transform_indices = @transform_5, window_bounds = array<i64: 2, 2, 1, 128>}, {pipeline_mode = #tpu.pipeline_mode<synchronous>, transform_indices = @transform_6, window_bounds = array<i64: 2, 2, 128, 128>}, {pipeline_mode = #tpu.pipeline_mode<synchronous>, transform_indices = @transform_7, window_bounds = array<i64: 2, 2, 1, 128>}, {transform_indices = @transform_8, window_bounds = array<i64: 1, 16, 128>}, {transform_indices = @transform_9, window_bounds = array<i64: 1, 16, 128>}]} {
    %cst = arith.constant 0.000000e+00 : f32
    %0 = vector.broadcast %cst : f32 to vector<1x1x128xf32>
    %c0 = arith.constant 0 : index
    %c7 = arith.constant 7 : index
    %c0_0 = arith.constant 0 : index
    %1 = vector.load %arg11[%c0, %c7, %c0_0] : memref<1x32x128xf32, #tpu.memory_space<vmem>>, vector<1x1x128xf32>
    tpu.vector_store %arg11[%c0, %c7, %c0_0], %0 {strides = array<i32>} : memref<1x32x128xf32, #tpu.memory_space<vmem>>, vector<1x1x128xf32>,
    %c0_1 = arith.constant 0 : index
    %c24 = arith.constant 24 : index
    %c0_2 = arith.constant 0 : index
    %2 = vector.load %arg11[%c0_1, %c24, %c0_2] : memref<1x32x128xf32, #tpu.memory_space<vmem>>, vector<1x1x128xf32>
    tpu.vector_store %arg11[%c0_1, %c24, %c0_2], %0 {strides = array<i32>} : memref<1x32x128xf32, #tpu.memory_space<vmem>>, vector<1x1x128xf32>,
    %c0_3 = arith.constant 0 : index
    %c0_4 = arith.constant 0 : index
    %c0_5 = arith.constant 0 : index
    %3 = vector.load %arg1[%c0_3, %c0_4, %c0_5] : memref<1x16x128xf32, #tpu.memory_space<vmem>>, vector<1x16x128xf32>
    %4 = vector.shape_cast %3 : vector<1x16x128xf32> to vector<16x128xf32>
    %c0_6 = arith.constant 0 : index
    %c0_7 = arith.constant 0 : index
    %c0_8 = arith.constant 0 : index
    %5 = vector.load %arg2[%c0_6, %c0_7, %c0_8] : memref<1x16x128xf32, #tpu.memory_space<vmem>>, vector<1x16x128xf32>
    %6 = vector.shape_cast %5 : vector<1x16x128xf32> to vector<16x128xf32>
    %7 = arith.truncf %4 : vector<16x128xf32> to vector<16x128xbf16>
    %c0_9 = arith.constant 0 : index
    %c0_10 = arith.constant 0 : index
    %c0_11 = arith.constant 0 : index
    %c0_12 = arith.constant 0 : index
    %8 = vector.load %arg3[%c0_9, %c0_10, %c0_11, %c0_12] : memref<2x2x128x128xbf16, #tpu.memory_space<vmem>>, vector<1x1x128x128xbf16>
    %9 = vector.shape_cast %8 : vector<1x1x128x128xbf16> to vector<128x128xbf16>
    %cst_13 = arith.constant dense<0.000000e+00> : vector<16x128xf32>
    %10 = tpu.matmul %7, %9, %cst_13 {dimension_numbers = #tpu.dot_dimension_numbers<[1], [0], [0], [1], [0, 0, 1, 1], [], []>} : vector<16x128xbf16>, vector<128x128xbf16>, vector<16x128xf32> -> vector<16x128xf32>
    %c0_14 = arith.constant 0 : index
    %c0_15 = arith.constant 0 : index
    %c0_16 = arith.constant 0 : index
    %c0_17 = arith.constant 0 : index
    %11 = vector.load %arg4[%c0_14, %c0_15, %c0_16, %c0_17] : memref<2x2x1x128xf32, #tpu.memory_space<vmem>>, vector<1x1x1x128xf32>
    %12 = vector.shape_cast %11 : vector<1x1x1x128xf32> to vector<1x128xf32>
    %13 = vector.broadcast %12 : vector<1x128xf32> to vector<16x128xf32>
    %14 = arith.addf %10, %13 : vector<16x128xf32>
    %cst_18 = arith.constant 0.000000e+00 : f32
    %15 = vector.broadcast %cst_18 : f32 to vector<16x128xf32>
    %16 = arith.maximumf %14, %15 : vector<16x128xf32>
    %17 = vector.shape_cast %16 : vector<16x128xf32> to vector<1x16x128xf32>
    %c0_19 = arith.constant 0 : index
    %c8 = arith.constant 8 : index
    %c0_20 = arith.constant 0 : index
    %18 = vector.load %arg11[%c0_19, %c8, %c0_20] : memref<1x32x128xf32, #tpu.memory_space<vmem>>, vector<1x16x128xf32>
    tpu.vector_store %arg11[%c0_19, %c8, %c0_20], %17 {strides = array<i32>} : memref<1x32x128xf32, #tpu.memory_space<vmem>>, vector<1x16x128xf32>,
    %c0_21 = arith.constant 0 : index
    %c7_22 = arith.constant 7 : index
    %c0_23 = arith.constant 0 : index
    %19 = vector.load %arg11[%c0_21, %c7_22, %c0_23] : memref<1x32x128xf32, #tpu.memory_space<vmem>>, vector<1x16x128xf32>
    %c0_24 = arith.constant 0 : index
    %c8_25 = arith.constant 8 : index
    %c0_26 = arith.constant 0 : index
    %20 = vector.load %arg11[%c0_24, %c8_25, %c0_26] : memref<1x32x128xf32, #tpu.memory_space<vmem>>, vector<1x16x128xf32>
    %c0_27 = arith.constant 0 : index
    %c9 = arith.constant 9 : index
    %c0_28 = arith.constant 0 : index
    %21 = vector.load %arg11[%c0_27, %c9, %c0_28] : memref<1x32x128xf32, #tpu.memory_space<vmem>>, vector<1x16x128xf32>
    %22 = tpu.concatenate %19, %20, %21 in 2 : vector<1x16x128xf32>, vector<1x16x128xf32>, vector<1x16x128xf32> -> vector<1x16x384xf32>
    %23 = vector.shape_cast %22 : vector<1x16x384xf32> to vector<16x384xf32>
    %24 = arith.truncf %23 : vector<16x384xf32> to vector<16x384xbf16>
    %c0_29 = arith.constant 0 : index
    %c0_30 = arith.constant 0 : index
    %c0_31 = arith.constant 0 : index
    %c0_32 = arith.constant 0 : index
    %25 = vector.load %arg5[%c0_29, %c0_30, %c0_31, %c0_32] : memref<2x2x384x128xbf16, #tpu.memory_space<vmem>>, vector<1x1x384x128xbf16>
    %26 = vector.shape_cast %25 : vector<1x1x384x128xbf16> to vector<384x128xbf16>
    %cst_33 = arith.constant dense<0.000000e+00> : vector<16x128xf32>
    %27 = tpu.matmul %24, %26, %cst_33 {dimension_numbers = #tpu.dot_dimension_numbers<[1], [0], [0], [1], [0, 0, 1, 1], [], []>} : vector<16x384xbf16>, vector<384x128xbf16>, vector<16x128xf32> -> vector<16x128xf32>
    %c0_34 = arith.constant 0 : index
    %c0_35 = arith.constant 0 : index
    %c0_36 = arith.constant 0 : index
    %c0_37 = arith.constant 0 : index
    %28 = vector.load %arg6[%c0_34, %c0_35, %c0_36, %c0_37] : memref<2x2x1x128xf32, #tpu.memory_space<vmem>>, vector<1x1x1x128xf32>
    %29 = vector.shape_cast %28 : vector<1x1x1x128xf32> to vector<1x128xf32>
    %30 = vector.broadcast %29 : vector<1x128xf32> to vector<16x128xf32>
    %31 = arith.addf %27, %30 : vector<16x128xf32>
    %32 = arith.addf %31, %4 : vector<16x128xf32>
    %cst_38 = arith.constant 0.000000e+00 : f32
    %33 = vector.broadcast %cst_38 : f32 to vector<16x128xf32>
    %34 = arith.maximumf %32, %33 : vector<16x128xf32>
    %35 = arith.truncf %6 : vector<16x128xf32> to vector<16x128xbf16>
    %c1 = arith.constant 1 : index
    %c0_39 = arith.constant 0 : index
    %c0_40 = arith.constant 0 : index
    %c0_41 = arith.constant 0 : index
    %36 = vector.load %arg3[%c1, %c0_39, %c0_40, %c0_41] : memref<2x2x128x128xbf16, #tpu.memory_space<vmem>>, vector<1x1x128x128xbf16>
    %37 = vector.shape_cast %36 : vector<1x1x128x128xbf16> to vector<128x128xbf16>
    %cst_42 = arith.constant dense<0.000000e+00> : vector<16x128xf32>
    %38 = tpu.matmul %35, %37, %cst_42 {dimension_numbers = #tpu.dot_dimension_numbers<[1], [0], [0], [1], [0, 0, 1, 1], [], []>} : vector<16x128xbf16>, vector<128x128xbf16>, vector<16x128xf32> -> vector<16x128xf32>
    %c1_43 = arith.constant 1 : index
    %c0_44 = arith.constant 0 : index
    %c0_45 = arith.constant 0 : index
    %c0_46 = arith.constant 0 : index
    %39 = vector.load %arg4[%c1_43, %c0_44, %c0_45, %c0_46] : memref<2x2x1x128xf32, #tpu.memory_space<vmem>>, vector<1x1x1x128xf32>
    %40 = vector.shape_cast %39 : vector<1x1x1x128xf32> to vector<1x128xf32>
    %41 = vector.broadcast %40 : vector<1x128xf32> to vector<16x128xf32>
    %42 = arith.addf %38, %41 : vector<16x128xf32>
    %cst_47 = arith.constant 0.000000e+00 : f32
    %43 = vector.broadcast %cst_47 : f32 to vector<16x128xf32>
    %44 = arith.maximumf %42, %43 : vector<16x128xf32>
    %45 = vector.shape_cast %44 : vector<16x128xf32> to vector<1x16x128xf32>
    %c0_48 = arith.constant 0 : index
    %c8_49 = arith.constant 8 : index
    %c0_50 = arith.constant 0 : index
    %46 = vector.load %arg11[%c0_48, %c8_49, %c0_50] : memref<1x32x128xf32, #tpu.memory_space<vmem>>, vector<1x16x128xf32>
    tpu.vector_store %arg11[%c0_48, %c8_49, %c0_50], %45 {strides = array<i32>} : memref<1x32x128xf32, #tpu.memory_space<vmem>>, vector<1x16x128xf32>,
    %c0_51 = arith.constant 0 : index
    %c7_52 = arith.constant 7 : index
    %c0_53 = arith.constant 0 : index
    %47 = vector.load %arg11[%c0_51, %c7_52, %c0_53] : memref<1x32x128xf32, #tpu.memory_space<vmem>>, vector<1x16x128xf32>
    %c0_54 = arith.constant 0 : index
    %c8_55 = arith.constant 8 : index
    %c0_56 = arith.constant 0 : index
    %48 = vector.load %arg11[%c0_54, %c8_55, %c0_56] : memref<1x32x128xf32, #tpu.memory_space<vmem>>, vector<1x16x128xf32>
    %c0_57 = arith.constant 0 : index
    %c9_58 = arith.constant 9 : index
    %c0_59 = arith.constant 0 : index
    %49 = vector.load %arg11[%c0_57, %c9_58, %c0_59] : memref<1x32x128xf32, #tpu.memory_space<vmem>>, vector<1x16x128xf32>
    %50 = tpu.concatenate %47, %48, %49 in 2 : vector<1x16x128xf32>, vector<1x16x128xf32>, vector<1x16x128xf32> -> vector<1x16x384xf32>
    %51 = vector.shape_cast %50 : vector<1x16x384xf32> to vector<16x384xf32>
    %52 = arith.truncf %51 : vector<16x384xf32> to vector<16x384xbf16>
    %c1_60 = arith.constant 1 : index
    %c0_61 = arith.constant 0 : index
    %c0_62 = arith.constant 0 : index
    %c0_63 = arith.constant 0 : index
    %53 = vector.load %arg5[%c1_60, %c0_61, %c0_62, %c0_63] : memref<2x2x384x128xbf16, #tpu.memory_space<vmem>>, vector<1x1x384x128xbf16>
    %54 = vector.shape_cast %53 : vector<1x1x384x128xbf16> to vector<384x128xbf16>
    %cst_64 = arith.constant dense<0.000000e+00> : vector<16x128xf32>
    %55 = tpu.matmul %52, %54, %cst_64 {dimension_numbers = #tpu.dot_dimension_numbers<[1], [0], [0], [1], [0, 0, 1, 1], [], []>} : vector<16x384xbf16>, vector<384x128xbf16>, vector<16x128xf32> -> vector<16x128xf32>
    %c1_65 = arith.constant 1 : index
    %c0_66 = arith.constant 0 : index
    %c0_67 = arith.constant 0 : index
    %c0_68 = arith.constant 0 : index
    %56 = vector.load %arg6[%c1_65, %c0_66, %c0_67, %c0_68] : memref<2x2x1x128xf32, #tpu.memory_space<vmem>>, vector<1x1x1x128xf32>
    %57 = vector.shape_cast %56 : vector<1x1x1x128xf32> to vector<1x128xf32>
    %58 = vector.broadcast %57 : vector<1x128xf32> to vector<16x128xf32>
    %59 = arith.addf %55, %58 : vector<16x128xf32>
    %60 = arith.addf %59, %6 : vector<16x128xf32>
    %cst_69 = arith.constant 0.000000e+00 : f32
    %61 = vector.broadcast %cst_69 : f32 to vector<16x128xf32>
    %62 = arith.maximumf %60, %61 : vector<16x128xf32>
    %63 = arith.truncf %34 : vector<16x128xf32> to vector<16x128xbf16>
    %c0_70 = arith.constant 0 : index
    %c0_71 = arith.constant 0 : index
    %c0_72 = arith.constant 0 : index
    %c0_73 = arith.constant 0 : index
    %64 = vector.load %arg7[%c0_70, %c0_71, %c0_72, %c0_73] : memref<2x2x128x128xbf16, #tpu.memory_space<vmem>>, vector<1x1x128x128xbf16>
    %65 = vector.shape_cast %64 : vector<1x1x128x128xbf16> to vector<128x128xbf16>
    %cst_74 = arith.constant dense<0.000000e+00> : vector<16x128xf32>
    %66 = tpu.matmul %63, %65, %cst_74 {dimension_numbers = #tpu.dot_dimension_numbers<[1], [0], [0], [1], [0, 0, 1, 1], [], []>} : vector<16x128xbf16>, vector<128x128xbf16>, vector<16x128xf32> -> vector<16x128xf32>
    %c0_75 = arith.constant 0 : index
    %c0_76 = arith.constant 0 : index
    %c0_77 = arith.constant 0 : index
    %c0_78 = arith.constant 0 : index
    %67 = vector.load %arg8[%c0_75, %c0_76, %c0_77, %c0_78] : memref<2x2x1x128xf32, #tpu.memory_space<vmem>>, vector<1x1x1x128xf32>
    %68 = vector.shape_cast %67 : vector<1x1x1x128xf32> to vector<1x128xf32>
    %69 = vector.broadcast %68 : vector<1x128xf32> to vector<16x128xf32>
    %70 = arith.addf %66, %69 : vector<16x128xf32>
    %71 = arith.truncf %62 : vector<16x128xf32> to vector<16x128xbf16>
    %c1_79 = arith.constant 1 : index
    %c0_80 = arith.constant 0 : index
    %c0_81 = arith.constant 0 : index
    %c0_82 = arith.constant 0 : index
    %72 = vector.load %arg7[%c1_79, %c0_80, %c0_81, %c0_82] : memref<2x2x128x128xbf16, #tpu.memory_space<vmem>>, vector<1x1x128x128xbf16>
    %73 = vector.shape_cast %72 : vector<1x1x128x128xbf16> to vector<128x128xbf16>
    %cst_83 = arith.constant dense<0.000000e+00> : vector<16x128xf32>
    %74 = tpu.matmul %71, %73, %cst_83 {dimension_numbers = #tpu.dot_dimension_numbers<[1], [0], [0], [1], [0, 0, 1, 1], [], []>} : vector<16x128xbf16>, vector<128x128xbf16>, vector<16x128xf32> -> vector<16x128xf32>
    %c1_84 = arith.constant 1 : index
    %c0_85 = arith.constant 0 : index
    %c0_86 = arith.constant 0 : index
    %c0_87 = arith.constant 0 : index
    %75 = vector.load %arg8[%c1_84, %c0_85, %c0_86, %c0_87] : memref<2x2x1x128xf32, #tpu.memory_space<vmem>>, vector<1x1x1x128xf32>
    %76 = vector.shape_cast %75 : vector<1x1x1x128xf32> to vector<1x128xf32>
    %77 = vector.broadcast %76 : vector<1x128xf32> to vector<16x128xf32>
    %78 = arith.addf %74, %77 : vector<16x128xf32>
    %79 = arith.addf %34, %78 : vector<16x128xf32>
    %80 = arith.addf %62, %70 : vector<16x128xf32>
    %81 = arith.truncf %79 : vector<16x128xf32> to vector<16x128xbf16>
    %c0_88 = arith.constant 0 : index
    %c1_89 = arith.constant 1 : index
    %c0_90 = arith.constant 0 : index
    %c0_91 = arith.constant 0 : index
    %82 = vector.load %arg3[%c0_88, %c1_89, %c0_90, %c0_91] : memref<2x2x128x128xbf16, #tpu.memory_space<vmem>>, vector<1x1x128x128xbf16>
    %83 = vector.shape_cast %82 : vector<1x1x128x128xbf16> to vector<128x128xbf16>
    %cst_92 = arith.constant dense<0.000000e+00> : vector<16x128xf32>
    %84 = tpu.matmul %81, %83, %cst_92 {dimension_numbers = #tpu.dot_dimension_numbers<[1], [0], [0], [1], [0, 0, 1, 1], [], []>} : vector<16x128xbf16>, vector<128x128xbf16>, vector<16x128xf32> -> vector<16x128xf32>
    %c0_93 = arith.constant 0 : index
    %c1_94 = arith.constant 1 : index
    %c0_95 = arith.constant 0 : index
    %c0_96 = arith.constant 0 : index
    %85 = vector.load %arg4[%c0_93, %c1_94, %c0_95, %c0_96] : memref<2x2x1x128xf32, #tpu.memory_space<vmem>>, vector<1x1x1x128xf32>
    %86 = vector.shape_cast %85 : vector<1x1x1x128xf32> to vector<1x128xf32>
    %87 = vector.broadcast %86 : vector<1x128xf32> to vector<16x128xf32>
    %88 = arith.addf %84, %87 : vector<16x128xf32>
    %cst_97 = arith.constant 0.000000e+00 : f32
    %89 = vector.broadcast %cst_97 : f32 to vector<16x128xf32>
    %90 = arith.maximumf %88, %89 : vector<16x128xf32>
    %91 = vector.shape_cast %90 : vector<16x128xf32> to vector<1x16x128xf32>
    %c0_98 = arith.constant 0 : index
    %c8_99 = arith.constant 8 : index
    %c0_100 = arith.constant 0 : index
    %92 = vector.load %arg11[%c0_98, %c8_99, %c0_100] : memref<1x32x128xf32, #tpu.memory_space<vmem>>, vector<1x16x128xf32>
    tpu.vector_store %arg11[%c0_98, %c8_99, %c0_100], %91 {strides = array<i32>} : memref<1x32x128xf32, #tpu.memory_space<vmem>>, vector<1x16x128xf32>,
    %c0_101 = arith.constant 0 : index
    %c7_102 = arith.constant 7 : index
    %c0_103 = arith.constant 0 : index
    %93 = vector.load %arg11[%c0_101, %c7_102, %c0_103] : memref<1x32x128xf32, #tpu.memory_space<vmem>>, vector<1x16x128xf32>
    %c0_104 = arith.constant 0 : index
    %c8_105 = arith.constant 8 : index
    %c0_106 = arith.constant 0 : index
    %94 = vector.load %arg11[%c0_104, %c8_105, %c0_106] : memref<1x32x128xf32, #tpu.memory_space<vmem>>, vector<1x16x128xf32>
    %c0_107 = arith.constant 0 : index
    %c9_108 = arith.constant 9 : index
    %c0_109 = arith.constant 0 : index
    %95 = vector.load %arg11[%c0_107, %c9_108, %c0_109] : memref<1x32x128xf32, #tpu.memory_space<vmem>>, vector<1x16x128xf32>
    %96 = tpu.concatenate %93, %94, %95 in 2 : vector<1x16x128xf32>, vector<1x16x128xf32>, vector<1x16x128xf32> -> vector<1x16x384xf32>
    %97 = vector.shape_cast %96 : vector<1x16x384xf32> to vector<16x384xf32>
    %98 = arith.truncf %97 : vector<16x384xf32> to vector<16x384xbf16>
    %c0_110 = arith.constant 0 : index
    %c1_111 = arith.constant 1 : index
    %c0_112 = arith.constant 0 : index
    %c0_113 = arith.constant 0 : index
    %99 = vector.load %arg5[%c0_110, %c1_111, %c0_112, %c0_113] : memref<2x2x384x128xbf16, #tpu.memory_space<vmem>>, vector<1x1x384x128xbf16>
    %100 = vector.shape_cast %99 : vector<1x1x384x128xbf16> to vector<384x128xbf16>
    %cst_114 = arith.constant dense<0.000000e+00> : vector<16x128xf32>
    %101 = tpu.matmul %98, %100, %cst_114 {dimension_numbers = #tpu.dot_dimension_numbers<[1], [0], [0], [1], [0, 0, 1, 1], [], []>} : vector<16x384xbf16>, vector<384x128xbf16>, vector<16x128xf32> -> vector<16x128xf32>
    %c0_115 = arith.constant 0 : index
    %c1_116 = arith.constant 1 : index
    %c0_117 = arith.constant 0 : index
    %c0_118 = arith.constant 0 : index
    %102 = vector.load %arg6[%c0_115, %c1_116, %c0_117, %c0_118] : memref<2x2x1x128xf32, #tpu.memory_space<vmem>>, vector<1x1x1x128xf32>
    %103 = vector.shape_cast %102 : vector<1x1x1x128xf32> to vector<1x128xf32>
    %104 = vector.broadcast %103 : vector<1x128xf32> to vector<16x128xf32>
    %105 = arith.addf %101, %104 : vector<16x128xf32>
    %106 = arith.addf %105, %79 : vector<16x128xf32>
    %cst_119 = arith.constant 0.000000e+00 : f32
    %107 = vector.broadcast %cst_119 : f32 to vector<16x128xf32>
    %108 = arith.maximumf %106, %107 : vector<16x128xf32>
    %109 = arith.truncf %80 : vector<16x128xf32> to vector<16x128xbf16>
    %c1_120 = arith.constant 1 : index
    %c1_121 = arith.constant 1 : index
    %c0_122 = arith.constant 0 : index
    %c0_123 = arith.constant 0 : index
    %110 = vector.load %arg3[%c1_120, %c1_121, %c0_122, %c0_123] : memref<2x2x128x128xbf16, #tpu.memory_space<vmem>>, vector<1x1x128x128xbf16>
    %111 = vector.shape_cast %110 : vector<1x1x128x128xbf16> to vector<128x128xbf16>
    %cst_124 = arith.constant dense<0.000000e+00> : vector<16x128xf32>
    %112 = tpu.matmul %109, %111, %cst_124 {dimension_numbers = #tpu.dot_dimension_numbers<[1], [0], [0], [1], [0, 0, 1, 1], [], []>} : vector<16x128xbf16>, vector<128x128xbf16>, vector<16x128xf32> -> vector<16x128xf32>
    %c1_125 = arith.constant 1 : index
    %c1_126 = arith.constant 1 : index
    %c0_127 = arith.constant 0 : index
    %c0_128 = arith.constant 0 : index
    %113 = vector.load %arg4[%c1_125, %c1_126, %c0_127, %c0_128] : memref<2x2x1x128xf32, #tpu.memory_space<vmem>>, vector<1x1x1x128xf32>
    %114 = vector.shape_cast %113 : vector<1x1x1x128xf32> to vector<1x128xf32>
    %115 = vector.broadcast %114 : vector<1x128xf32> to vector<16x128xf32>
    %116 = arith.addf %112, %115 : vector<16x128xf32>
    %cst_129 = arith.constant 0.000000e+00 : f32
    %117 = vector.broadcast %cst_129 : f32 to vector<16x128xf32>
    %118 = arith.maximumf %116, %117 : vector<16x128xf32>
    %119 = vector.shape_cast %118 : vector<16x128xf32> to vector<1x16x128xf32>
    %c0_130 = arith.constant 0 : index
    %c8_131 = arith.constant 8 : index
    %c0_132 = arith.constant 0 : index
    %120 = vector.load %arg11[%c0_130, %c8_131, %c0_132] : memref<1x32x128xf32, #tpu.memory_space<vmem>>, vector<1x16x128xf32>
    tpu.vector_store %arg11[%c0_130, %c8_131, %c0_132], %119 {strides = array<i32>} : memref<1x32x128xf32, #tpu.memory_space<vmem>>, vector<1x16x128xf32>,
    %c0_133 = arith.constant 0 : index
    %c7_134 = arith.constant 7 : index
    %c0_135 = arith.constant 0 : index
    %121 = vector.load %arg11[%c0_133, %c7_134, %c0_135] : memref<1x32x128xf32, #tpu.memory_space<vmem>>, vector<1x16x128xf32>
    %c0_136 = arith.constant 0 : index
    %c8_137 = arith.constant 8 : index
    %c0_138 = arith.constant 0 : index
    %122 = vector.load %arg11[%c0_136, %c8_137, %c0_138] : memref<1x32x128xf32, #tpu.memory_space<vmem>>, vector<1x16x128xf32>
    %c0_139 = arith.constant 0 : index
    %c9_140 = arith.constant 9 : index
    %c0_141 = arith.constant 0 : index
    %123 = vector.load %arg11[%c0_139, %c9_140, %c0_141] : memref<1x32x128xf32, #tpu.memory_space<vmem>>, vector<1x16x128xf32>
    %124 = tpu.concatenate %121, %122, %123 in 2 : vector<1x16x128xf32>, vector<1x16x128xf32>, vector<1x16x128xf32> -> vector<1x16x384xf32>
    %125 = vector.shape_cast %124 : vector<1x16x384xf32> to vector<16x384xf32>
    %126 = arith.truncf %125 : vector<16x384xf32> to vector<16x384xbf16>
    %c1_142 = arith.constant 1 : index
    %c1_143 = arith.constant 1 : index
    %c0_144 = arith.constant 0 : index
    %c0_145 = arith.constant 0 : index
    %127 = vector.load %arg5[%c1_142, %c1_143, %c0_144, %c0_145] : memref<2x2x384x128xbf16, #tpu.memory_space<vmem>>, vector<1x1x384x128xbf16>
    %128 = vector.shape_cast %127 : vector<1x1x384x128xbf16> to vector<384x128xbf16>
    %cst_146 = arith.constant dense<0.000000e+00> : vector<16x128xf32>
    %129 = tpu.matmul %126, %128, %cst_146 {dimension_numbers = #tpu.dot_dimension_numbers<[1], [0], [0], [1], [0, 0, 1, 1], [], []>} : vector<16x384xbf16>, vector<384x128xbf16>, vector<16x128xf32> -> vector<16x128xf32>
    %c1_147 = arith.constant 1 : index
    %c1_148 = arith.constant 1 : index
    %c0_149 = arith.constant 0 : index
    %c0_150 = arith.constant 0 : index
    %130 = vector.load %arg6[%c1_147, %c1_148, %c0_149, %c0_150] : memref<2x2x1x128xf32, #tpu.memory_space<vmem>>, vector<1x1x1x128xf32>
    %131 = vector.shape_cast %130 : vector<1x1x1x128xf32> to vector<1x128xf32>
    %132 = vector.broadcast %131 : vector<1x128xf32> to vector<16x128xf32>
    %133 = arith.addf %129, %132 : vector<16x128xf32>
    %134 = arith.addf %133, %80 : vector<16x128xf32>
    %cst_151 = arith.constant 0.000000e+00 : f32
    %135 = vector.broadcast %cst_151 : f32 to vector<16x128xf32>
    %136 = arith.maximumf %134, %135 : vector<16x128xf32>
    %137 = arith.truncf %108 : vector<16x128xf32> to vector<16x128xbf16>
    %c0_152 = arith.constant 0 : index
    %c1_153 = arith.constant 1 : index
    %c0_154 = arith.constant 0 : index
    %c0_155 = arith.constant 0 : index
    %138 = vector.load %arg7[%c0_152, %c1_153, %c0_154, %c0_155] : memref<2x2x128x128xbf16, #tpu.memory_space<vmem>>, vector<1x1x128x128xbf16>
    %139 = vector.shape_cast %138 : vector<1x1x128x128xbf16> to vector<128x128xbf16>
    %cst_156 = arith.constant dense<0.000000e+00> : vector<16x128xf32>
    %140 = tpu.matmul %137, %139, %cst_156 {dimension_numbers = #tpu.dot_dimension_numbers<[1], [0], [0], [1], [0, 0, 1, 1], [], []>} : vector<16x128xbf16>, vector<128x128xbf16>, vector<16x128xf32> -> vector<16x128xf32>
    %c0_157 = arith.constant 0 : index
    %c1_158 = arith.constant 1 : index
    %c0_159 = arith.constant 0 : index
    %c0_160 = arith.constant 0 : index
    %141 = vector.load %arg8[%c0_157, %c1_158, %c0_159, %c0_160] : memref<2x2x1x128xf32, #tpu.memory_space<vmem>>, vector<1x1x1x128xf32>
    %142 = vector.shape_cast %141 : vector<1x1x1x128xf32> to vector<1x128xf32>
    %143 = vector.broadcast %142 : vector<1x128xf32> to vector<16x128xf32>
    %144 = arith.addf %140, %143 : vector<16x128xf32>
    %145 = arith.truncf %136 : vector<16x128xf32> to vector<16x128xbf16>
    %c1_161 = arith.constant 1 : index
    %c1_162 = arith.constant 1 : index
    %c0_163 = arith.constant 0 : index
    %c0_164 = arith.constant 0 : index
    %146 = vector.load %arg7[%c1_161, %c1_162, %c0_163, %c0_164] : memref<2x2x128x128xbf16, #tpu.memory_space<vmem>>, vector<1x1x128x128xbf16>
    %147 = vector.shape_cast %146 : vector<1x1x128x128xbf16> to vector<128x128xbf16>
    %cst_165 = arith.constant dense<0.000000e+00> : vector<16x128xf32>
    %148 = tpu.matmul %145, %147, %cst_165 {dimension_numbers = #tpu.dot_dimension_numbers<[1], [0], [0], [1], [0, 0, 1, 1], [], []>} : vector<16x128xbf16>, vector<128x128xbf16>, vector<16x128xf32> -> vector<16x128xf32>
    %c1_166 = arith.constant 1 : index
    %c1_167 = arith.constant 1 : index
    %c0_168 = arith.constant 0 : index
    %c0_169 = arith.constant 0 : index
    %149 = vector.load %arg8[%c1_166, %c1_167, %c0_168, %c0_169] : memref<2x2x1x128xf32, #tpu.memory_space<vmem>>, vector<1x1x1x128xf32>
    %150 = vector.shape_cast %149 : vector<1x1x1x128xf32> to vector<1x128xf32>
    %151 = vector.broadcast %150 : vector<1x128xf32> to vector<16x128xf32>
    %152 = arith.addf %148, %151 : vector<16x128xf32>
    %153 = arith.addf %108, %152 : vector<16x128xf32>
    %154 = arith.addf %136, %144 : vector<16x128xf32>
    %155 = vector.shape_cast %153 : vector<16x128xf32> to vector<1x16x128xf32>
    %c0_170 = arith.constant 0 : index
    %c0_171 = arith.constant 0 : index
    %c0_172 = arith.constant 0 : index
    %156 = vector.load %arg9[%c0_170, %c0_171, %c0_172] : memref<1x16x128xf32, #tpu.memory_space<vmem>>, vector<1x16x128xf32>
    tpu.vector_store %arg9[%c0_170, %c0_171, %c0_172], %155 {strides = array<i32>} : memref<1x16x128xf32, #tpu.memory_space<vmem>>, vector<1x16x128xf32>,
    %157 = vector.shape_cast %154 : vector<16x128xf32> to vector<1x16x128xf32>
    %c0_173 = arith.constant 0 : index
    %c0_174 = arith.constant 0 : index
    %c0_175 = arith.constant 0 : index
    %158 = vector.load %arg10[%c0_173, %c0_174, %c0_175] : memref<1x16x128xf32, #tpu.memory_space<vmem>>, vector<1x16x128xf32>
    tpu.vector_store %arg10[%c0_173, %c0_174, %c0_175], %157 {strides = array<i32>} : memref<1x16x128xf32, #tpu.memory_space<vmem>>, vector<1x16x128xf32>,
    return
  }
  func.func @transform_0(%arg0: i32) -> (i32, i32, i32) {
    %c0_i32 = arith.constant 0 : i32
    %c0_i32_0 = arith.constant 0 : i32
    %c0_i32_1 = arith.constant 0 : i32
    return %arg0, %c0_i32, %c0_i32_0 : i32, i32, i32
  }
  func.func @transform_1(%arg0: i32) -> (i32, i32, i32) {
    %c0_i32 = arith.constant 0 : i32
    %c0_i32_0 = arith.constant 0 : i32
    %c0_i32_1 = arith.constant 0 : i32
    return %arg0, %c0_i32, %c0_i32_0 : i32, i32, i32
  }
  func.func @transform_2(%arg0: i32) -> (i32, i32, i32, i32) {
    %c0_i32 = arith.constant 0 : i32
    %c0_i32_0 = arith.constant 0 : i32
    %c0_i32_1 = arith.constant 0 : i32
    %c0_i32_2 = arith.constant 0 : i32
    %c0_i32_3 = arith.constant 0 : i32
    return %c0_i32, %c0_i32_0, %c0_i32_1, %c0_i32_2 : i32, i32, i32, i32
  }
  func.func @transform_3(%arg0: i32) -> (i32, i32, i32, i32) {
    %c0_i32 = arith.constant 0 : i32
    %c0_i32_0 = arith.constant 0 : i32
    %c0_i32_1 = arith.constant 0 : i32
    %c0_i32_2 = arith.constant 0 : i32
    %c0_i32_3 = arith.constant 0 : i32
    return %c0_i32, %c0_i32_0, %c0_i32_1, %c0_i32_2 : i32, i32, i32, i32
  }
  func.func @transform_4(%arg0: i32) -> (i32, i32, i32, i32) {
    %c0_i32 = arith.constant 0 : i32
    %c0_i32_0 = arith.constant 0 : i32
    %c0_i32_1 = arith.constant 0 : i32
    %c0_i32_2 = arith.constant 0 : i32
    %c0_i32_3 = arith.constant 0 : i32
    return %c0_i32, %c0_i32_0, %c0_i32_1, %c0_i32_2 : i32, i32, i32, i32
  }
  func.func @transform_5(%arg0: i32) -> (i32, i32, i32, i32) {
    %c0_i32 = arith.constant 0 : i32
    %c0_i32_0 = arith.constant 0 : i32
    %c0_i32_1 = arith.constant 0 : i32
    %c0_i32_2 = arith.constant 0 : i32
    %c0_i32_3 = arith.constant 0 : i32
    return %c0_i32, %c0_i32_0, %c0_i32_1, %c0_i32_2 : i32, i32, i32, i32
  }
  func.func @transform_6(%arg0: i32) -> (i32, i32, i32, i32) {
    %c0_i32 = arith.constant 0 : i32
    %c0_i32_0 = arith.constant 0 : i32
    %c0_i32_1 = arith.constant 0 : i32
    %c0_i32_2 = arith.constant 0 : i32
    %c0_i32_3 = arith.constant 0 : i32
    return %c0_i32, %c0_i32_0, %c0_i32_1, %c0_i32_2 : i32, i32, i32, i32
  }
  func.func @transform_7(%arg0: i32) -> (i32, i32, i32, i32) {
    %c0_i32 = arith.constant 0 : i32
    %c0_i32_0 = arith.constant 0 : i32
    %c0_i32_1 = arith.constant 0 : i32
    %c0_i32_2 = arith.constant 0 : i32
    %c0_i32_3 = arith.constant 0 : i32
    return %c0_i32, %c0_i32_0, %c0_i32_1, %c0_i32_2 : i32, i32, i32, i32
  }
  func.func @transform_8(%arg0: i32) -> (i32, i32, i32) {
    %c0_i32 = arith.constant 0 : i32
    %c0_i32_0 = arith.constant 0 : i32
    %c0_i32_1 = arith.constant 0 : i32
    return %arg0, %c0_i32, %c0_i32_0 : i32, i32, i32
  }
  func.func @transform_9(%arg0: i32) -> (i32, i32, i32) {
    %c0_i32 = arith.constant 0 : i32
    %c0_i32_0 = arith.constant 0 : i32
    %c0_i32_1 = arith.constant 0 : i32
    return %arg0, %c0_i32, %c0_i32_0 : i32, i32, i32
  }
}

</mosaic_0001>

<llo_original>
// kernel: combine_rev_forward.1
$region0: #{combine_rev_forward.1}
  #allocation0 [shape = 'u32[]', space=smem, size = 0x4, offset = 0x4, fixed_abs, tag = 'smem constant byte address 0x4 - core index']
  #allocation1 [shape = 'u32[144,128]{1,0:T(1,128)}', space=vmem, size = 0x12000, scoped, tag = 'internal scratch']
  #allocation2 [shape = 'f32[1,32,128]{2,1,0:T(8,128)}', space=vmem, size = 0x4000, scoped, tag = 'scratch operand']
  %s0 = inlined_call_operand.vmem [shape: f32[2,16,128], index: 0, kind: input, shape index: {}]
  %s1 = inlined_call_operand.vmem [shape: f32[2,16,128], index: 1, kind: input, shape index: {}]
  %s2 = inlined_call_operand.vmem [shape: bf16[2,2,128,128], index: 2, kind: input, shape index: {}]
  %s3 = inlined_call_operand.vmem [shape: f32[2,2,1,128], index: 3, kind: input, shape index: {}]
  %s4 = inlined_call_operand.vmem [shape: bf16[2,2,384,128], index: 4, kind: input, shape index: {}]
  %s5 = inlined_call_operand.vmem [shape: f32[2,2,1,128], index: 5, kind: input, shape index: {}]
  %s6 = inlined_call_operand.vmem [shape: bf16[2,2,128,128], index: 6, kind: input, shape index: {}]
  %s7 = inlined_call_operand.vmem [shape: f32[2,2,1,128], index: 7, kind: input, shape index: {}]
  %s8 = inlined_call_operand.vmem [shape: f32[2,16,128], index: 8, kind: output, shape index: {0}]
  %s9 = inlined_call_operand.vmem [shape: f32[2,16,128], index: 9, kind: output, shape index: {1}]
  %10 = xla_tuple %s8, %s9
  %s11 = sld [smem:[#allocation0]]
  $region73: #{combine_rev_forward.1} parent=0
    _
  %s13 = ssub.s32 1, %s11
  %s14 = scalar_select 0, %s13, %s11
  loop: start=0, step=1, limit=4
  $region2: #{combine_rev_forward.1} parent=0 // loop_pre_header
    _
  $region3: #{combine_rev_forward.1} parent=0 // loop_header
    %s16 = sphi 0, %s20
    %p17 = scmp.ge.s32.totalorder %s16, 4
    %s26 = sphi 0, %s28
    %s29 = sphi 0, %s26
    %s30 = sphi 0, %s29
    %s46 = sphi 0, %s30
    %s52 = sphi 0, %s54
    %s55 = sphi 0, %s52
    %s56 = sphi 0, %s55
    %s72 = sphi 0, %s56
    %s76 = sphi 0, %s76
    %s78 = sphi 0, %s76
    %s79 = sphi 0, %s78
    %s93 = sphi 0, %s79
    %s97 = sphi 0, %s97
    %s99 = sphi 0, %s97
    %s100 = sphi 0, %s99
    %s114 = sphi 0, %s100
    %s118 = sphi 0, %s118
    %s120 = sphi 0, %s118
    %s121 = sphi 0, %s120
    %s135 = sphi 0, %s121
    %s139 = sphi 0, %s139
    %s141 = sphi 0, %s139
    %s142 = sphi 0, %s141
    %s156 = sphi 0, %s142
    %s160 = sphi 0, %s160
    %s162 = sphi 0, %s160
    %s163 = sphi 0, %s162
    %s177 = sphi 0, %s163
    %s181 = sphi 0, %s181
    %s183 = sphi 0, %s181
    %s184 = sphi 0, %s183
    %s198 = sphi 0, %s184
    %s204 = sphi 0, %s206
    %s207 = sphi 0, %s204
    %s208 = sphi 0, %s207
    %s224 = sphi 0, %s208
    %s230 = sphi 0, %s232
    %s233 = sphi 0, %s230
    %s234 = sphi 0, %s233
    %s250 = sphi 0, %s234
  $region4: #{combine_rev_forward.1} parent=0 // loop_header_branch
    %19 = sbr.rel (%p17) target = $region8
  $region5: #{combine_rev_forward.1} parent=0 // loop_body
    %s21 = ssub.s32 %s16, 1
    %s22 = ssub.s32 %s16, 2
    %s23 = sadd.s32 %s16, 1
    %s24 = ssub.s32 %s16, %s23
    %p25 = scmp.eq.s32.totalorder %s24, 0
    %s27 = sadd.s32 %s26, 1
    %s28 = scalar_select %p25, %s26, %s27
    %p31 = pneg %p25
    %p32 = scmp.eq.s32.totalorder %s16, 1
    %p33 = por %p31, %p32
    %p34 = scmp.ne.s32.totalorder %s26, %s29
    %p35 = scmp.eq.s32.totalorder %s16, 0
    %p36 = por %p34, %p35
    %p37 = scmp.ne.s32.totalorder %s26, %s29
    %p38 = scmp.eq.s32.totalorder %s21, 1
    %p39 = por %p37, %p38
    %p40 = scmp.ne.s32.totalorder %s29, %s30
    %p41 = scmp.eq.s32.totalorder %s21, 0
    %p42 = por %p40, %p41
    %p43 = scmp.ne.s32.totalorder %s29, %s30
    %p44 = scmp.eq.s32.totalorder %s22, 1
    %p45 = por %p43, %p44
    %p47 = scmp.ne.s32.totalorder %s30, %s46
    %p48 = scmp.eq.s32.totalorder %s22, 0
    %p49 = por %p47, %p48
    %s50 = ssub.s32 %s16, %s23
    %p51 = scmp.eq.s32.totalorder %s50, 0
    %s53 = sadd.s32 %s52, 1
    %s54 = scalar_select %p51, %s52, %s53
    %p57 = pneg %p51
    %p58 = scmp.eq.s32.totalorder %s16, 1
    %p59 = por %p57, %p58
    %p60 = scmp.ne.s32.totalorder %s52, %s55
    %p61 = scmp.eq.s32.totalorder %s16, 0
    %p62 = por %p60, %p61
    %p63 = scmp.ne.s32.totalorder %s52, %s55
    %p64 = scmp.eq.s32.totalorder %s21, 1
    %p65 = por %p63, %p64
    %p66 = scmp.ne.s32.totalorder %s55, %s56
    %p67 = scmp.eq.s32.totalorder %s21, 0
    %p68 = por %p66, %p67
    %p69 = scmp.ne.s32.totalorder %s55, %s56
    %p70 = scmp.eq.s32.totalorder %s22, 1
    %p71 = por %p69, %p70
    %p73 = scmp.ne.s32.totalorder %s56, %s72
    %p74 = scmp.eq.s32.totalorder %s22, 0
    %p75 = por %p73, %p74
    %s77 = sadd.s32 %s76, 1
    %p80 = scmp.eq.s32.totalorder %s16, 1
    %p81 = scmp.ne.s32.totalorder %s76, %s78
    %p82 = scmp.eq.s32.totalorder %s16, 0
    %p83 = por %p81, %p82
    %p84 = scmp.ne.s32.totalorder %s76, %s78
    %p85 = scmp.eq.s32.totalorder %s21, 1
    %p86 = por %p84, %p85
    %p87 = scmp.ne.s32.totalorder %s78, %s79
    %p88 = scmp.eq.s32.totalorder %s21, 0
    %p89 = por %p87, %p88
    %p90 = scmp.ne.s32.totalorder %s78, %s79
    %p91 = scmp.eq.s32.totalorder %s22, 1
    %p92 = por %p90, %p91
    %p94 = scmp.ne.s32.totalorder %s79, %s93
    %p95 = scmp.eq.s32.totalorder %s22, 0
    %p96 = por %p94, %p95
    %s98 = sadd.s32 %s97, 1
    %p101 = scmp.eq.s32.totalorder %s16, 1
    %p102 = scmp.ne.s32.totalorder %s97, %s99
    %p103 = scmp.eq.s32.totalorder %s16, 0
    %p104 = por %p102, %p103
    %p105 = scmp.ne.s32.totalorder %s97, %s99
    %p106 = scmp.eq.s32.totalorder %s21, 1
    %p107 = por %p105, %p106
    %p108 = scmp.ne.s32.totalorder %s99, %s100
    %p109 = scmp.eq.s32.totalorder %s21, 0
    %p110 = por %p108, %p109
    %p111 = scmp.ne.s32.totalorder %s99, %s100
    %p112 = scmp.eq.s32.totalorder %s22, 1
    %p113 = por %p111, %p112
    %p115 = scmp.ne.s32.totalorder %s100, %s114
    %p116 = scmp.eq.s32.totalorder %s22, 0
    %p117 = por %p115, %p116
    %s119 = sadd.s32 %s118, 1
    %p122 = scmp.eq.s32.totalorder %s16, 1
    %p123 = scmp.ne.s32.totalorder %s118, %s120
    %p124 = scmp.eq.s32.totalorder %s16, 0
    %p125 = por %p123, %p124
    %p126 = scmp.ne.s32.totalorder %s118, %s120
    %p127 = scmp.eq.s32.totalorder %s21, 1
    %p128 = por %p126, %p127
    %p129 = scmp.ne.s32.totalorder %s120, %s121
    %p130 = scmp.eq.s32.totalorder %s21, 0
    %p131 = por %p129, %p130
    %p132 = scmp.ne.s32.totalorder %s120, %s121
    %p133 = scmp.eq.s32.totalorder %s22, 1
    %p134 = por %p132, %p133
    %p136 = scmp.ne.s32.totalorder %s121, %s135
    %p137 = scmp.eq.s32.totalorder %s22, 0
    %p138 = por %p136, %p137
    %s140 = sadd.s32 %s139, 1
    %p143 = scmp.eq.s32.totalorder %s16, 1
    %p144 = scmp.ne.s32.totalorder %s139, %s141
    %p145 = scmp.eq.s32.totalorder %s16, 0
    %p146 = por %p144, %p145
    %p147 = scmp.ne.s32.totalorder %s139, %s141
    %p148 = scmp.eq.s32.totalorder %s21, 1
    %p149 = por %p147, %p148
    %p150 = scmp.ne.s32.totalorder %s141, %s142
    %p151 = scmp.eq.s32.totalorder %s21, 0
    %p152 = por %p150, %p151
    %p153 = scmp.ne.s32.totalorder %s141, %s142
    %p154 = scmp.eq.s32.totalorder %s22, 1
    %p155 = por %p153, %p154
    %p157 = scmp.ne.s32.totalorder %s142, %s156
    %p158 = scmp.eq.s32.totalorder %s22, 0
    %p159 = por %p157, %p158
    %s161 = sadd.s32 %s160, 1
    %p164 = scmp.eq.s32.totalorder %s16, 1
    %p165 = scmp.ne.s32.totalorder %s160, %s162
    %p166 = scmp.eq.s32.totalorder %s16, 0
    %p167 = por %p165, %p166
    %p168 = scmp.ne.s32.totalorder %s160, %s162
    %p169 = scmp.eq.s32.totalorder %s21, 1
    %p170 = por %p168, %p169
    %p171 = scmp.ne.s32.totalorder %s162, %s163
    %p172 = scmp.eq.s32.totalorder %s21, 0
    %p173 = por %p171, %p172
    %p174 = scmp.ne.s32.totalorder %s162, %s163
    %p175 = scmp.eq.s32.totalorder %s22, 1
    %p176 = por %p174, %p175
    %p178 = scmp.ne.s32.totalorder %s163, %s177
    %p179 = scmp.eq.s32.totalorder %s22, 0
    %p180 = por %p178, %p179
    %s182 = sadd.s32 %s181, 1
    %p185 = scmp.eq.s32.totalorder %s16, 1
    %p186 = scmp.ne.s32.totalorder %s181, %s183
    %p187 = scmp.eq.s32.totalorder %s16, 0
    %p188 = por %p186, %p187
    %p189 = scmp.ne.s32.totalorder %s181, %s183
    %p190 = scmp.eq.s32.totalorder %s21, 1
    %p191 = por %p189, %p190
    %p192 = scmp.ne.s32.totalorder %s183, %s184
    %p193 = scmp.eq.s32.totalorder %s21, 0
    %p194 = por %p192, %p193
    %p195 = scmp.ne.s32.totalorder %s183, %s184
    %p196 = scmp.eq.s32.totalorder %s22, 1
    %p197 = por %p195, %p196
    %p199 = scmp.ne.s32.totalorder %s184, %s198
    %p200 = scmp.eq.s32.totalorder %s22, 0
    %p201 = por %p199, %p200
    %s202 = ssub.s32 %s16, %s23
    %p203 = scmp.eq.s32.totalorder %s202, 0
    %s205 = sadd.s32 %s204, 1
    %s206 = scalar_select %p203, %s204, %s205
    %p209 = pneg %p203
    %p210 = scmp.eq.s32.totalorder %s16, 1
    %p211 = por %p209, %p210
    %p212 = scmp.ne.s32.totalorder %s204, %s207
    %p213 = scmp.eq.s32.totalorder %s16, 0
    %p214 = por %p212, %p213
    %p215 = scmp.ne.s32.totalorder %s204, %s207
    %p216 = scmp.eq.s32.totalorder %s21, 1
    %p217 = por %p215, %p216
    %p218 = scmp.ne.s32.totalorder %s207, %s208
    %p219 = scmp.eq.s32.totalorder %s21, 0
    %p220 = por %p218, %p219
    %p221 = scmp.ne.s32.totalorder %s207, %s208
    %p222 = scmp.eq.s32.totalorder %s22, 1
    %p223 = por %p221, %p222
    %p225 = scmp.ne.s32.totalorder %s208, %s224
    %p226 = scmp.eq.s32.totalorder %s22, 0
    %p227 = por %p225, %p226
    %s228 = ssub.s32 %s16, %s23
    %p229 = scmp.eq.s32.totalorder %s228, 0
    %s231 = sadd.s32 %s230, 1
    %s232 = scalar_select %p229, %s230, %s231
    %p235 = pneg %p229
    %p236 = scmp.eq.s32.totalorder %s16, 1
    %p237 = por %p235, %p236
    %p238 = scmp.ne.s32.totalorder %s230, %s233
    %p239 = scmp.eq.s32.totalorder %s16, 0
    %p240 = por %p238, %p239
    %p241 = scmp.ne.s32.totalorder %s230, %s233
    %p242 = scmp.eq.s32.totalorder %s21, 1
    %p243 = por %p241, %p242
    %p244 = scmp.ne.s32.totalorder %s233, %s234
    %p245 = scmp.eq.s32.totalorder %s21, 0
    %p246 = por %p244, %p245
    %p247 = scmp.ne.s32.totalorder %s233, %s234
    %p248 = scmp.eq.s32.totalorder %s22, 1
    %p249 = por %p247, %p248
    %p251 = scmp.ne.s32.totalorder %s234, %s250
    %p252 = scmp.eq.s32.totalorder %s22, 0
    %p253 = por %p251, %p252
    %p254 = scmp.le.s32.totalorder 1, %s16
    %p255 = scmp.lt.s32.totalorder %s16, 3
    %p256 = pnand %p254, %p255
    %p257 = pneg %p256
    // Predicated region
    $region9: #{combine_rev_forward.1} parent=5 // pred_check
      _
    $region10: #{combine_rev_forward.1} parent=5 // pred_check_branch
      %259 = sbr.rel (%p256) target = $region12
    $region11: #{combine_rev_forward.1} parent=5 // pred_region
      %s260 = ssub.s32 %s16, 1
      // Predicated region
      $region13: #{combine_rev_forward.1} parent=11 // pred_check
        %p261 = pneg %p89
      $region14: #{combine_rev_forward.1} parent=11 // pred_check_branch
        %263 = sbr.rel (%p261) target = $region16
      $region15: #{combine_rev_forward.1} parent=11 // pred_region
        _
      $region16: #{combine_rev_forward.1} parent=11 // pred_fallthru
        _
      // Predicated region
      $region17: #{combine_rev_forward.1} parent=11 // pred_check
        %p264 = pneg %p110
      $region18: #{combine_rev_forward.1} parent=11 // pred_check_branch
        %266 = sbr.rel (%p264) target = $region20
      $region19: #{combine_rev_forward.1} parent=11 // pred_region
        _
      $region20: #{combine_rev_forward.1} parent=11 // pred_fallthru
        _
      // Predicated region
      $region21: #{combine_rev_forward.1} parent=11 // pred_check
        %p267 = pneg %p131
      $region22: #{combine_rev_forward.1} parent=11 // pred_check_branch
        %269 = sbr.rel (%p267) target = $region24
      $region23: #{combine_rev_forward.1} parent=11 // pred_region
        _
      $region24: #{combine_rev_forward.1} parent=11 // pred_fallthru
        _
      // Predicated region
      $region25: #{combine_rev_forward.1} parent=11 // pred_check
        %p270 = pneg %p152
      $region26: #{combine_rev_forward.1} parent=11 // pred_check_branch
        %272 = sbr.rel (%p270) target = $region28
      $region27: #{combine_rev_forward.1} parent=11 // pred_region
        _
      $region28: #{combine_rev_forward.1} parent=11 // pred_fallthru
        _
      // Predicated region
      $region29: #{combine_rev_forward.1} parent=11 // pred_check
        %p273 = pneg %p173
      $region30: #{combine_rev_forward.1} parent=11 // pred_check_branch
        %275 = sbr.rel (%p273) target = $region32
      $region31: #{combine_rev_forward.1} parent=11 // pred_region
        _
      $region32: #{combine_rev_forward.1} parent=11 // pred_fallthru
        _
      // Predicated region
      $region33: #{combine_rev_forward.1} parent=11 // pred_check
        %p276 = pneg %p194
      $region34: #{combine_rev_forward.1} parent=11 // pred_check_branch
        %278 = sbr.rel (%p276) target = $region36
      $region35: #{combine_rev_forward.1} parent=11 // pred_region
        _
      $region36: #{combine_rev_forward.1} parent=11 // pred_fallthru
        _
    $region12: #{combine_rev_forward.1} parent=5 // pred_fallthru
      _
    %p279 = scmp.lt.s32.totalorder %s16, 2
    // Predicated region
    $region37: #{combine_rev_forward.1} parent=5 // pred_check
      %p280 = pneg %p279
    $region38: #{combine_rev_forward.1} parent=5 // pred_check_branch
      %282 = sbr.rel (%p280) target = $region40
    $region39: #{combine_rev_forward.1} parent=5 // pred_region
      // Predicated region
      $region41: #{combine_rev_forward.1} parent=39 // pred_check
        %p283 = pneg %p36
      $region42: #{combine_rev_forward.1} parent=39 // pred_check_branch
        %285 = sbr.rel (%p283) target = $region44
      $region43: #{combine_rev_forward.1} parent=39 // pred_region
        %p286 = scmp.lt.s32.totalorder %s16, 1
        %s287 = scalar_select %p286, %s16, 1
        %s288 = smul.addr %s287, 2
        %s289 = smul.addr %s288, 8
        %s290 = scalar_lea.vmem %s0, %s289
      $region44: #{combine_rev_forward.1} parent=39 // pred_fallthru
        _
      // Predicated region
      $region45: #{combine_rev_forward.1} parent=39 // pred_check
        %p291 = pneg %p62
      $region46: #{combine_rev_forward.1} parent=39 // pred_check_branch
        %293 = sbr.rel (%p291) target = $region48
      $region47: #{combine_rev_forward.1} parent=39 // pred_region
        %p294 = scmp.lt.s32.totalorder %s16, 1
        %s295 = scalar_select %p294, %s16, 1
        %s296 = smul.addr %s295, 2
        %s297 = smul.addr %s296, 8
        %s298 = scalar_lea.vmem %s1, %s297
      $region48: #{combine_rev_forward.1} parent=39 // pred_fallthru
        _
    $region40: #{combine_rev_forward.1} parent=5 // pred_fallthru
      _
    %p299 = scmp.le.s32.totalorder 1, %s16
    %p300 = scmp.lt.s32.totalorder %s16, 3
    %p301 = pnand %p299, %p300
    %p302 = pneg %p301
    // Predicated region
    $region49: #{combine_rev_forward.1} parent=5 // pred_check
      _
    $region50: #{combine_rev_forward.1} parent=5 // pred_check_branch
      %304 = sbr.rel (%p301) target = $region52
    $region51: #{combine_rev_forward.1} parent=5 // pred_region
      %s305 = ssub.s32 %s16, 1
      %p306 = scmp.lt.s32.totalorder %s21, 1
      %s307 = scalar_select %p306, %s21, 1
      %s308 = smul.addr %s307, 2
      %s309 = smul.addr %s308, 8
      %s310 = scalar_lea.vmem %s0, %s309
      %p311 = pneg %p42
      %p312 = pneg %p39
      %p313 = scmp.lt.s32.totalorder %s21, 1
      %s314 = scalar_select %p313, %s21, 1
      %s315 = smul.addr %s314, 2
      %s316 = smul.addr %s315, 8
      %s317 = scalar_lea.vmem %s1, %s316
      %p318 = pneg %p68
      %p319 = pneg %p65
      %p320 = pneg %p89
      %p321 = pneg %p86
      %p322 = pneg %p110
      %p323 = pneg %p107
      %p324 = pneg %p131
      %p325 = pneg %p128
      %p326 = pneg %p152
      %p327 = pneg %p149
      %p328 = pneg %p173
      %p329 = pneg %p170
      %p330 = pneg %p194
      %p331 = pneg %p191
      %p332 = pneg %p220
      %p333 = pneg %p217
      %p334 = scmp.lt.s32.totalorder %s21, 1
      %s335 = scalar_select %p334, %s21, 1
      %s336 = smul.addr %s335, 2
      %s337 = smul.addr %s336, 8
      %s338 = scalar_lea.vmem %s8, %s337
      %p339 = pneg %p246
      %p340 = pneg %p243
      %p341 = scmp.lt.s32.totalorder %s21, 1
      %s342 = scalar_select %p341, %s21, 1
      %s343 = smul.addr %s342, 2
      %s344 = smul.addr %s343, 8
      %s345 = scalar_lea.vmem %s9, %s344
      %p346 = scmp.lt.s32.totalorder %s21, 1
      %s347 = scalar_select %p346, %s21, 1
      %s348 = smul.addr %s347, 2
      %s349 = smul.addr %s348, 8
      %s350 = scalar_lea.vmem %s0, %s349
      %p351 = scmp.lt.s32.totalorder %s21, 1
      %s352 = scalar_select %p351, %s21, 1
      %s353 = smul.addr %s352, 2
      %s354 = smul.addr %s353, 8
      %s355 = scalar_lea.vmem %s1, %s354
      %p356 = scmp.lt.s32.totalorder %s21, 1
      %s357 = scalar_select %p356, %s21, 1
      %s358 = smul.addr %s357, 2
      %s359 = smul.addr %s358, 8
      %s360 = scalar_lea.vmem %s8, %s359
      %p361 = scmp.lt.s32.totalorder %s21, 1
      %s362 = scalar_select %p361, %s21, 1
      %s363 = smul.addr %s362, 2
      %s364 = smul.addr %s363, 8
      %s365 = scalar_lea.vmem %s9, %s364
      %367 = vst [vmem:[#allocation2 + $0x7] sm:$0x1] 0.0
      %368 = vst [vmem:[#allocation2 + $0x18] sm:$0x1] 0.0
      %v369 = vld [vmem:[%s350] sm:$0xff]
      %v370 = vld [vmem:[%s350 + $0x8] sm:$0xff]
      %v371 = vld [vmem:[%s355] sm:$0xff]
      %v372 = vld [vmem:[%s355 + $0x8] sm:$0xff]
      %v373 = vpack.c.bf16 %v370, %v369
      %v374 = vld [vmem:[%s2] sm:$0xf]
      %v375 = vld [vmem:[%s2 + $0x4] sm:$0xf]
      %v376 = vld [vmem:[%s2 + $0x8] sm:$0xf]
      %v377 = vld [vmem:[%s2 + $0xc] sm:$0xf]
      %v378 = vld [vmem:[%s2 + $0x10] sm:$0xf]
      %v379 = vld [vmem:[%s2 + $0x14] sm:$0xf]
      %v380 = vld [vmem:[%s2 + $0x18] sm:$0xf]
      %v381 = vld [vmem:[%s2 + $0x1c] sm:$0xf]
      %v382 = vld [vmem:[%s2 + $0x20] sm:$0xf]
      %v383 = vld [vmem:[%s2 + $0x24] sm:$0xf]
      %v384 = vld [vmem:[%s2 + $0x28] sm:$0xf]
      %v385 = vld [vmem:[%s2 + $0x2c] sm:$0xf]
      %v386 = vld [vmem:[%s2 + $0x30] sm:$0xf]
      %v387 = vld [vmem:[%s2 + $0x34] sm:$0xf]
      %v388 = vld [vmem:[%s2 + $0x38] sm:$0xf]
      %v389 = vld [vmem:[%s2 + $0x3c] sm:$0xf]
      %v390 = vld [vmem:[%s3] sm:$0x1]
      %v392 = vlaneseq
      %v393 = vshrl.u32 %v392, 7
      %v394 = vsub.s32 0, %v393
      %v395 = vrot.slane %v390, %v394
      %v413 = vunpack.c.l.b16 %v374
      %v414 = vunpack.c.l.b16 %v375
      %v415 = vunpack.c.l.b16 %v376
      %v416 = vunpack.c.l.b16 %v377
      %v417 = vunpack.c.l.b16 %v378
      %v418 = vunpack.c.l.b16 %v379
      %v419 = vunpack.c.l.b16 %v380
      %v420 = vunpack.c.l.b16 %v381
      %v421 = vunpack.c.l.b16 %v382
      %v422 = vunpack.c.l.b16 %v383
      %v423 = vunpack.c.l.b16 %v384
      %v424 = vunpack.c.l.b16 %v385
      %v425 = vunpack.c.l.b16 %v386
      %v426 = vunpack.c.l.b16 %v387
      %v427 = vunpack.c.l.b16 %v388
      %v428 = vunpack.c.l.b16 %v389
      %v429 = vpack.c.b16 %v414, %v413
      %v430 = vpack.c.b16 %v416, %v415
      %v431 = vpack.c.b16 %v418, %v417
      %v432 = vpack.c.b16 %v420, %v419
      %v433 = vpack.c.b16 %v422, %v421
      %v434 = vpack.c.b16 %v424, %v423
      %v435 = vpack.c.b16 %v426, %v425
      %v436 = vpack.c.b16 %v428, %v427
      %445 = vmatprep.subr.bf16.mxu0 0
      %446 = vmatpush1.bf16.msra.mxu0 %v429
      %447 = vmatprep.subr.bf16.mxu0 0
      %448 = vmatpush1.bf16.msra.mxu0 %v430
      %449 = vmatprep.subr.bf16.mxu0 0
      %450 = vmatpush1.bf16.msra.mxu0 %v431
      %451 = vmatprep.subr.bf16.mxu0 0
      %452 = vmatpush1.bf16.msra.mxu0 %v432
      %453 = vmatprep.subr.bf16.mxu0 0
      %454 = vmatpush1.bf16.msra.mxu0 %v433
      %455 = vmatprep.subr.bf16.mxu0 0
      %456 = vmatpush1.bf16.msra.mxu0 %v434
      %457 = vmatprep.subr.bf16.mxu0 0
      %458 = vmatpush1.bf16.msra.mxu0 %v435
      %459 = vmatprep.subr.bf16.mxu0 0
      %460 = vmatpush1.bf16.msra.mxu0 %v436
      %461 = vmatprep.subr.bf16.mxu0 0
      %462 = vmatpush1.bf16.msra.mxu0 0
      %463 = vmatprep.subr.bf16.mxu0 0
      %464 = vmatpush1.bf16.msra.mxu0 0
      %465 = vmatprep.subr.bf16.mxu0 0
      %466 = vmatpush1.bf16.msra.mxu0 0
      %467 = vmatprep.subr.bf16.mxu0 0
      %468 = vmatpush1.bf16.msra.mxu0 0
      %469 = vmatprep.subr.bf16.mxu0 0
      %470 = vmatpush1.bf16.msra.mxu0 0
      %471 = vmatprep.subr.bf16.mxu0 0
      %472 = vmatpush1.bf16.msra.mxu0 0
      %473 = vmatprep.subr.bf16.mxu0 0
      %474 = vmatpush1.bf16.msra.mxu0 0
      %475 = vmatprep.subr.bf16.mxu0 0
      %476 = vmatpush1.bf16.msra.mxu0 0
      %477 = vmatprep.mubr.bf16.mxu0 0
      %478 = vmatmul.mubr.bf16.gmra.mrb[0].mxu0 %v373
      %v479 = vpop.f32.mrb[0].mxu0
      %v480 = vadd.f32 %v395, %v479
      %v481 = vpop.f32.mrb[0].mxu0
      %v482 = vpop.f32.mrb[0].mxu0
      %v483 = vadd.f32 %v395, %v482
      %v484 = vpop.f32.mrb[0].mxu0
      %485 = vdwg.mxu0
      %v486 = vmax.f32 %v480, 0.0
      %v487 = vmax.f32 %v483, 0.0
      %488 = vst [vmem:[#allocation2 + $0x8] sm:$0xff] %v486
      %489 = vst [vmem:[#allocation2 + $0x10] sm:$0xff] %v487
      %v490 = vld [vmem:[#allocation2 + $0x7] sm:$0xff]
      %v491 = vld [vmem:[#allocation2 + $0xf] sm:$0xff]
      %v492 = vld [vmem:[#allocation2 + $0x8] sm:$0xff]
      %v493 = vld [vmem:[#allocation2 + $0x10] sm:$0xff]
      %v494 = vld [vmem:[#allocation2 + $0x9] sm:$0xff]
      %v495 = vld [vmem:[#allocation2 + $0x11] sm:$0xff]
      %v496 = vpack.c.bf16 %v491, %v490
      %v497 = vpack.c.bf16 %v493, %v492
      %v498 = vpack.c.bf16 %v495, %v494
      %v499 = vld [vmem:[%s4] sm:$0xf]
      %v500 = vld [vmem:[%s4 + $0x4] sm:$0xf]
      %v501 = vld [vmem:[%s4 + $0x8] sm:$0xf]
      %v502 = vld [vmem:[%s4 + $0xc] sm:$0xf]
      %v503 = vld [vmem:[%s4 + $0x10] sm:$0xf]
      %v504 = vld [vmem:[%s4 + $0x14] sm:$0xf]
      %v505 = vld [vmem:[%s4 + $0x18] sm:$0xf]
      %v506 = vld [vmem:[%s4 + $0x1c] sm:$0xf]
      %v507 = vld [vmem:[%s4 + $0x20] sm:$0xf]
      %v508 = vld [vmem:[%s4 + $0x24] sm:$0xf]
      %v509 = vld [vmem:[%s4 + $0x28] sm:$0xf]
      %v510 = vld [vmem:[%s4 + $0x2c] sm:$0xf]
      %v511 = vld [vmem:[%s4 + $0x30] sm:$0xf]
      %v512 = vld [vmem:[%s4 + $0x34] sm:$0xf]
      %v513 = vld [vmem:[%s4 + $0x38] sm:$0xf]
      %v514 = vld [vmem:[%s4 + $0x3c] sm:$0xf]
      %v515 = vld [vmem:[%s4 + $0x40] sm:$0xf]
      %v516 = vld [vmem:[%s4 + $0x44] sm:$0xf]
      %v517 = vld [vmem:[%s4 + $0x48] sm:$0xf]
      %v518 = vld [vmem:[%s4 + $0x4c] sm:$0xf]
      %v519 = vld [vmem:[%s4 + $0x50] sm:$0xf]
      %v520 = vld [vmem:[%s4 + $0x54] sm:$0xf]
      %v521 = vld [vmem:[%s4 + $0x58] sm:$0xf]
      %v522 = vld [vmem:[%s4 + $0x5c] sm:$0xf]
      %v523 = vld [vmem:[%s4 + $0x60] sm:$0xf]
      %v524 = vld [vmem:[%s4 + $0x64] sm:$0xf]
      %v525 = vld [vmem:[%s4 + $0x68] sm:$0xf]
      %v526 = vld [vmem:[%s4 + $0x6c] sm:$0xf]
      %v527 = vld [vmem:[%s4 + $0x70] sm:$0xf]
      %v528 = vld [vmem:[%s4 + $0x74] sm:$0xf]
      %v529 = vld [vmem:[%s4 + $0x78] sm:$0xf]
      %v530 = vld [vmem:[%s4 + $0x7c] sm:$0xf]
      %v531 = vld [vmem:[%s4 + $0x80] sm:$0xf]
      %v532 = vld [vmem:[%s4 + $0x84] sm:$0xf]
      %v533 = vld [vmem:[%s4 + $0x88] sm:$0xf]
      %v534 = vld [vmem:[%s4 + $0x8c] sm:$0xf]
      %v535 = vld [vmem:[%s4 + $0x90] sm:$0xf]
      %v536 = vld [vmem:[%s4 + $0x94] sm:$0xf]
      %v537 = vld [vmem:[%s4 + $0x98] sm:$0xf]
      %v538 = vld [vmem:[%s4 + $0x9c] sm:$0xf]
      %v539 = vld [vmem:[%s4 + $0xa0] sm:$0xf]
      %v540 = vld [vmem:[%s4 + $0xa4] sm:$0xf]
      %v541 = vld [vmem:[%s4 + $0xa8] sm:$0xf]
      %v542 = vld [vmem:[%s4 + $0xac] sm:$0xf]
      %v543 = vld [vmem:[%s4 + $0xb0] sm:$0xf]
      %v544 = vld [vmem:[%s4 + $0xb4] sm:$0xf]
      %v545 = vld [vmem:[%s4 + $0xb8] sm:$0xf]
      %v546 = vld [vmem:[%s4 + $0xbc] sm:$0xf]
      %v547 = vld [vmem:[%s5] sm:$0x1]
      %v549 = vlaneseq
      %v550 = vshrl.u32 %v549, 7
      %v551 = vsub.s32 0, %v550
      %v552 = vrot.slane %v547, %v551
      %v602 = vunpack.c.l.b16 %v499
      %v603 = vunpack.c.l.b16 %v500
      %v604 = vunpack.c.l.b16 %v501
      %v605 = vunpack.c.l.b16 %v502
      %v606 = vunpack.c.l.b16 %v503
      %v607 = vunpack.c.l.b16 %v504
      %v608 = vunpack.c.l.b16 %v505
      %v609 = vunpack.c.l.b16 %v506
      %v610 = vunpack.c.l.b16 %v507
      %v611 = vunpack.c.l.b16 %v508
      %v612 = vunpack.c.l.b16 %v509
      %v613 = vunpack.c.l.b16 %v510
      %v614 = vunpack.c.l.b16 %v511
      %v615 = vunpack.c.l.b16 %v512
      %v616 = vunpack.c.l.b16 %v513
      %v617 = vunpack.c.l.b16 %v514
      %v618 = vunpack.c.l.b16 %v515
      %v619 = vunpack.c.l.b16 %v516
      %v620 = vunpack.c.l.b16 %v517
      %v621 = vunpack.c.l.b16 %v518
      %v622 = vunpack.c.l.b16 %v519
      %v623 = vunpack.c.l.b16 %v520
      %v624 = vunpack.c.l.b16 %v521
      %v625 = vunpack.c.l.b16 %v522
      %v626 = vunpack.c.l.b16 %v523
      %v627 = vunpack.c.l.b16 %v524
      %v628 = vunpack.c.l.b16 %v525
      %v629 = vunpack.c.l.b16 %v526
      %v630 = vunpack.c.l.b16 %v527
      %v631 = vunpack.c.l.b16 %v528
      %v632 = vunpack.c.l.b16 %v529
      %v633 = vunpack.c.l.b16 %v530
      %v634 = vunpack.c.l.b16 %v531
      %v635 = vunpack.c.l.b16 %v532
      %v636 = vunpack.c.l.b16 %v533
      %v637 = vunpack.c.l.b16 %v534
      %v638 = vunpack.c.l.b16 %v535
      %v639 = vunpack.c.l.b16 %v536
      %v640 = vunpack.c.l.b16 %v537
      %v641 = vunpack.c.l.b16 %v538
      %v642 = vunpack.c.l.b16 %v539
      %v643 = vunpack.c.l.b16 %v540
      %v644 = vunpack.c.l.b16 %v541
      %v645 = vunpack.c.l.b16 %v542
      %v646 = vunpack.c.l.b16 %v543
      %v647 = vunpack.c.l.b16 %v544
      %v648 = vunpack.c.l.b16 %v545
      %v649 = vunpack.c.l.b16 %v546
      %v650 = vpack.c.b16 %v603, %v602
      %v651 = vpack.c.b16 %v605, %v604
      %v652 = vpack.c.b16 %v607, %v606
      %v653 = vpack.c.b16 %v609, %v608
      %v654 = vpack.c.b16 %v611, %v610
      %v655 = vpack.c.b16 %v613, %v612
      %v656 = vpack.c.b16 %v615, %v614
      %v657 = vpack.c.b16 %v617, %v616
      %v658 = vpack.c.b16 %v619, %v618
      %v659 = vpack.c.b16 %v621, %v620
      %v660 = vpack.c.b16 %v623, %v622
      %v661 = vpack.c.b16 %v625, %v624
      %v662 = vpack.c.b16 %v627, %v626
      %v663 = vpack.c.b16 %v629, %v628
      %v664 = vpack.c.b16 %v631, %v630
      %v665 = vpack.c.b16 %v633, %v632
      %v666 = vpack.c.b16 %v635, %v634
      %v667 = vpack.c.b16 %v637, %v636
      %v668 = vpack.c.b16 %v639, %v638
      %v669 = vpack.c.b16 %v641, %v640
      %v670 = vpack.c.b16 %v643, %v642
      %v671 = vpack.c.b16 %v645, %v644
      %v672 = vpack.c.b16 %v647, %v646
      %v673 = vpack.c.b16 %v649, %v648
      %698 = vmatprep.subr.bf16.mxu0 0
      %699 = vmatpush1.bf16.msra.mxu0 %v650
      %700 = vmatprep.subr.bf16.mxu0 0
      %701 = vmatpush1.bf16.msra.mxu0 %v651
      %702 = vmatprep.subr.bf16.mxu0 0
      %703 = vmatpush1.bf16.msra.mxu0 %v652
      %704 = vmatprep.subr.bf16.mxu0 0
      %705 = vmatpush1.bf16.msra.mxu0 %v653
      %706 = vmatprep.subr.bf16.mxu0 0
      %707 = vmatpush1.bf16.msra.mxu0 %v654
      %708 = vmatprep.subr.bf16.mxu0 0
      %709 = vmatpush1.bf16.msra.mxu0 %v655
      %710 = vmatprep.subr.bf16.mxu0 0
      %711 = vmatpush1.bf16.msra.mxu0 %v656
      %712 = vmatprep.subr.bf16.mxu0 0
      %713 = vmatpush1.bf16.msra.mxu0 %v657
      %714 = vmatprep.subr.bf16.mxu0 0
      %715 = vmatpush1.bf16.msra.mxu0 %v658
      %716 = vmatprep.subr.bf16.mxu0 0
      %717 = vmatpush1.bf16.msra.mxu0 %v659
      %718 = vmatprep.subr.bf16.mxu0 0
      %719 = vmatpush1.bf16.msra.mxu0 %v660
      %720 = vmatprep.subr.bf16.mxu0 0
      %721 = vmatpush1.bf16.msra.mxu0 %v661
      %722 = vmatprep.subr.bf16.mxu0 0
      %723 = vmatpush1.bf16.msra.mxu0 %v662
      %724 = vmatprep.subr.bf16.mxu0 0
      %725 = vmatpush1.bf16.msra.mxu0 %v663
      %726 = vmatprep.subr.bf16.mxu0 0
      %727 = vmatpush1.bf16.msra.mxu0 %v664
      %728 = vmatprep.subr.bf16.mxu0 0
      %729 = vmatpush1.bf16.msra.mxu0 %v665
      %730 = vmatprep.mubr.bf16.mxu0 %v497
      %731 = vmatmul.mubr.bf16.gmra.mrb[0].mxu0 %v496
      %v732 = vpop.f32.mrb[0].mxu0
      %v733 = vadd.f32 %v552, %v732
      %v734 = vpop.f32.mrb[0].mxu0
      %v735 = vpop.f32.mrb[0].mxu0
      %v736 = vadd.f32 %v552, %v735
      %v737 = vpop.f32.mrb[0].mxu0
      %738 = vdwg.mxu0
      %739 = vmatprep.subr.bf16.mxu0 0
      %740 = vmatpush1.bf16.msra.mxu0 %v666
      %741 = vmatprep.subr.bf16.mxu0 0
      %742 = vmatpush1.bf16.msra.mxu0 %v667
      %743 = vmatprep.subr.bf16.mxu0 0
      %744 = vmatpush1.bf16.msra.mxu0 %v668
      %745 = vmatprep.subr.bf16.mxu0 0
      %746 = vmatpush1.bf16.msra.mxu0 %v669
      %747 = vmatprep.subr.bf16.mxu0 0
      %748 = vmatpush1.bf16.msra.mxu0 %v670
      %749 = vmatprep.subr.bf16.mxu0 0
      %750 = vmatpush1.bf16.msra.mxu0 %v671
      %751 = vmatprep.subr.bf16.mxu0 0
      %752 = vmatpush1.bf16.msra.mxu0 %v672
      %753 = vmatprep.subr.bf16.mxu0 0
      %754 = vmatpush1.bf16.msra.mxu0 %v673
      %755 = vmatprep.subr.bf16.mxu0 0
      %756 = vmatpush1.bf16.msra.mxu0 0
      %757 = vmatprep.subr.bf16.mxu0 0
      %758 = vmatpush1.bf16.msra.mxu0 0
      %759 = vmatprep.subr.bf16.mxu0 0
      %760 = vmatpush1.bf16.msra.mxu0 0
      %761 = vmatprep.subr.bf16.mxu0 0
      %762 = vmatpush1.bf16.msra.mxu0 0
      %763 = vmatprep.subr.bf16.mxu0 0
      %764 = vmatpush1.bf16.msra.mxu0 0
      %765 = vmatprep.subr.bf16.mxu0 0
      %766 = vmatpush1.bf16.msra.mxu0 0
      %767 = vmatprep.subr.bf16.mxu0 0
      %768 = vmatpush1.bf16.msra.mxu0 0
      %769 = vmatprep.subr.bf16.mxu0 0
      %770 = vmatpush1.bf16.msra.mxu0 0
      %771 = vmatprep.mubr.bf16.mxu0 0
      %772 = vmatmul.mubr.bf16.gmra.mrb[0].mxu0 %v498
      %v773 = vpop.f32.mrb[0].mxu0
      %v774 = vadd.f32 %v733, %v773
      %v775 = vpop.f32.mrb[0].mxu0
      %v776 = vpop.f32.mrb[0].mxu0
      %v777 = vadd.f32 %v736, %v776
      %v778 = vpop.f32.mrb[0].mxu0
      %779 = vdwg.mxu0
      %v780 = vadd.f32 %v774, %v369
      %v781 = vadd.f32 %v777, %v370
      %v782 = vmax.f32 %v780, 0.0
      %v783 = vmax.f32 %v781, 0.0
      %v784 = vpack.c.bf16 %v372, %v371
      %s785 = scalar_lea.vmem %s2, 128
      %v786 = vld [vmem:[%s785] sm:$0xf]
      %v787 = vld [vmem:[%s785 + $0x4] sm:$0xf]
      %v788 = vld [vmem:[%s785 + $0x8] sm:$0xf]
      %v789 = vld [vmem:[%s785 + $0xc] sm:$0xf]
      %v790 = vld [vmem:[%s785 + $0x10] sm:$0xf]
      %v791 = vld [vmem:[%s785 + $0x14] sm:$0xf]
      %v792 = vld [vmem:[%s785 + $0x18] sm:$0xf]
      %v793 = vld [vmem:[%s785 + $0x1c] sm:$0xf]
      %v794 = vld [vmem:[%s785 + $0x20] sm:$0xf]
      %v795 = vld [vmem:[%s785 + $0x24] sm:$0xf]
      %v796 = vld [vmem:[%s785 + $0x28] sm:$0xf]
      %v797 = vld [vmem:[%s785 + $0x2c] sm:$0xf]
      %v798 = vld [vmem:[%s785 + $0x30] sm:$0xf]
      %v799 = vld [vmem:[%s785 + $0x34] sm:$0xf]
      %v800 = vld [vmem:[%s785 + $0x38] sm:$0xf]
      %v801 = vld [vmem:[%s785 + $0x3c] sm:$0xf]
      %s802 = scalar_lea.vmem %s3, 2
      %v803 = vld [vmem:[%s802] sm:$0x1]
      %v805 = vlaneseq
      %v806 = vshrl.u32 %v805, 7
      %v807 = vsub.s32 0, %v806
      %v808 = vrot.slane %v803, %v807
      %v826 = vunpack.c.l.b16 %v786
      %v827 = vunpack.c.l.b16 %v787
      %v828 = vunpack.c.l.b16 %v788
      %v829 = vunpack.c.l.b16 %v789
      %v830 = vunpack.c.l.b16 %v790
      %v831 = vunpack.c.l.b16 %v791
      %v832 = vunpack.c.l.b16 %v792
      %v833 = vunpack.c.l.b16 %v793
      %v834 = vunpack.c.l.b16 %v794
      %v835 = vunpack.c.l.b16 %v795
      %v836 = vunpack.c.l.b16 %v796
      %v837 = vunpack.c.l.b16 %v797
      %v838 = vunpack.c.l.b16 %v798
      %v839 = vunpack.c.l.b16 %v799
      %v840 = vunpack.c.l.b16 %v800
      %v841 = vunpack.c.l.b16 %v801
      %v842 = vpack.c.b16 %v827, %v826
      %v843 = vpack.c.b16 %v829, %v828
      %v844 = vpack.c.b16 %v831, %v830
      %v845 = vpack.c.b16 %v833, %v832
      %v846 = vpack.c.b16 %v835, %v834
      %v847 = vpack.c.b16 %v837, %v836
      %v848 = vpack.c.b16 %v839, %v838
      %v849 = vpack.c.b16 %v841, %v840
      %858 = vmatprep.subr.bf16.mxu0 0
      %859 = vmatpush1.bf16.msra.mxu0 %v842
      %860 = vmatprep.subr.bf16.mxu0 0
      %861 = vmatpush1.bf16.msra.mxu0 %v843
      %862 = vmatprep.subr.bf16.mxu0 0
      %863 = vmatpush1.bf16.msra.mxu0 %v844
      %864 = vmatprep.subr.bf16.mxu0 0
      %865 = vmatpush1.bf16.msra.mxu0 %v845
      %866 = vmatprep.subr.bf16.mxu0 0
      %867 = vmatpush1.bf16.msra.mxu0 %v846
      %868 = vmatprep.subr.bf16.mxu0 0
      %869 = vmatpush1.bf16.msra.mxu0 %v847
      %870 = vmatprep.subr.bf16.mxu0 0
      %871 = vmatpush1.bf16.msra.mxu0 %v848
      %872 = vmatprep.subr.bf16.mxu0 0
      %873 = vmatpush1.bf16.msra.mxu0 %v849
      %874 = vmatprep.subr.bf16.mxu0 0
      %875 = vmatpush1.bf16.msra.mxu0 0
      %876 = vmatprep.subr.bf16.mxu0 0
      %877 = vmatpush1.bf16.msra.mxu0 0
      %878 = vmatprep.subr.bf16.mxu0 0
      %879 = vmatpush1.bf16.msra.mxu0 0
      %880 = vmatprep.subr.bf16.mxu0 0
      %881 = vmatpush1.bf16.msra.mxu0 0
      %882 = vmatprep.subr.bf16.mxu0 0
      %883 = vmatpush1.bf16.msra.mxu0 0
      %884 = vmatprep.subr.bf16.mxu0 0
      %885 = vmatpush1.bf16.msra.mxu0 0
      %886 = vmatprep.subr.bf16.mxu0 0
      %887 = vmatpush1.bf16.msra.mxu0 0
      %888 = vmatprep.subr.bf16.mxu0 0
      %889 = vmatpush1.bf16.msra.mxu0 0
      %890 = vmatprep.mubr.bf16.mxu0 0
      %891 = vmatmul.mubr.bf16.gmra.mrb[0].mxu0 %v784
      %v892 = vpop.f32.mrb[0].mxu0
      %v893 = vadd.f32 %v808, %v892
      %v894 = vpop.f32.mrb[0].mxu0
      %v895 = vpop.f32.mrb[0].mxu0
      %v896 = vadd.f32 %v808, %v895
      %v897 = vpop.f32.mrb[0].mxu0
      %898 = vdwg.mxu0
      %v899 = vmax.f32 %v893, 0.0
      %v900 = vmax.f32 %v896, 0.0
      %901 = vst [vmem:[#allocation2 + $0x8] sm:$0xff] %v899
      %902 = vst [vmem:[#allocation2 + $0x10] sm:$0xff] %v900
      %v903 = vld [vmem:[#allocation2 + $0x7] sm:$0xff]
      %v904 = vld [vmem:[#allocation2 + $0xf] sm:$0xff]
      %v905 = vld [vmem:[#allocation2 + $0x8] sm:$0xff]
      %v906 = vld [vmem:[#allocation2 + $0x10] sm:$0xff]
      %v907 = vld [vmem:[#allocation2 + $0x9] sm:$0xff]
      %v908 = vld [vmem:[#allocation2 + $0x11] sm:$0xff]
      %v909 = vpack.c.bf16 %v904, %v903
      %v910 = vpack.c.bf16 %v906, %v905
      %v911 = vpack.c.bf16 %v908, %v907
      %s912 = scalar_lea.vmem %s4, 384
      %v913 = vld [vmem:[%s912] sm:$0xf]
      %v914 = vld [vmem:[%s912 + $0x4] sm:$0xf]
      %v915 = vld [vmem:[%s912 + $0x8] sm:$0xf]
      %v916 = vld [vmem:[%s912 + $0xc] sm:$0xf]
      %v917 = vld [vmem:[%s912 + $0x10] sm:$0xf]
      %v918 = vld [vmem:[%s912 + $0x14] sm:$0xf]
      %v919 = vld [vmem:[%s912 + $0x18] sm:$0xf]
      %v920 = vld [vmem:[%s912 + $0x1c] sm:$0xf]
      %v921 = vld [vmem:[%s912 + $0x20] sm:$0xf]
      %v922 = vld [vmem:[%s912 + $0x24] sm:$0xf]
      %v923 = vld [vmem:[%s912 + $0x28] sm:$0xf]
      %v924 = vld [vmem:[%s912 + $0x2c] sm:$0xf]
      %v925 = vld [vmem:[%s912 + $0x30] sm:$0xf]
      %v926 = vld [vmem:[%s912 + $0x34] sm:$0xf]
      %v927 = vld [vmem:[%s912 + $0x38] sm:$0xf]
      %v928 = vld [vmem:[%s912 + $0x3c] sm:$0xf]
      %v929 = vld [vmem:[%s912 + $0x40] sm:$0xf]
      %v930 = vld [vmem:[%s912 + $0x44] sm:$0xf]
      %v931 = vld [vmem:[%s912 + $0x48] sm:$0xf]
      %v932 = vld [vmem:[%s912 + $0x4c] sm:$0xf]
      %v933 = vld [vmem:[%s912 + $0x50] sm:$0xf]
      %v934 = vld [vmem:[%s912 + $0x54] sm:$0xf]
      %v935 = vld [vmem:[%s912 + $0x58] sm:$0xf]
      %v936 = vld [vmem:[%s912 + $0x5c] sm:$0xf]
      %v937 = vld [vmem:[%s912 + $0x60] sm:$0xf]
      %v938 = vld [vmem:[%s912 + $0x64] sm:$0xf]
      %v939 = vld [vmem:[%s912 + $0x68] sm:$0xf]
      %v940 = vld [vmem:[%s912 + $0x6c] sm:$0xf]
      %v941 = vld [vmem:[%s912 + $0x70] sm:$0xf]
      %v942 = vld [vmem:[%s912 + $0x74] sm:$0xf]
      %v943 = vld [vmem:[%s912 + $0x78] sm:$0xf]
      %v944 = vld [vmem:[%s912 + $0x7c] sm:$0xf]
      %v945 = vld [vmem:[%s912 + $0x80] sm:$0xf]
      %v946 = vld [vmem:[%s912 + $0x84] sm:$0xf]
      %v947 = vld [vmem:[%s912 + $0x88] sm:$0xf]
      %v948 = vld [vmem:[%s912 + $0x8c] sm:$0xf]
      %v949 = vld [vmem:[%s912 + $0x90] sm:$0xf]
      %v950 = vld [vmem:[%s912 + $0x94] sm:$0xf]
      %v951 = vld [vmem:[%s912 + $0x98] sm:$0xf]
      %v952 = vld [vmem:[%s912 + $0x9c] sm:$0xf]
      %v953 = vld [vmem:[%s912 + $0xa0] sm:$0xf]
      %v954 = vld [vmem:[%s912 + $0xa4] sm:$0xf]
      %v955 = vld [vmem:[%s912 + $0xa8] sm:$0xf]
      %v956 = vld [vmem:[%s912 + $0xac] sm:$0xf]
      %v957 = vld [vmem:[%s912 + $0xb0] sm:$0xf]
      %v958 = vld [vmem:[%s912 + $0xb4] sm:$0xf]
      %v959 = vld [vmem:[%s912 + $0xb8] sm:$0xf]
      %v960 = vld [vmem:[%s912 + $0xbc] sm:$0xf]
      %s961 = scalar_lea.vmem %s5, 2
      %v962 = vld [vmem:[%s961] sm:$0x1]
      %v964 = vlaneseq
      %v965 = vshrl.u32 %v964, 7
      %v966 = vsub.s32 0, %v965
      %v967 = vrot.slane %v962, %v966
      %v1017 = vunpack.c.l.b16 %v913
      %v1018 = vunpack.c.l.b16 %v914
      %v1019 = vunpack.c.l.b16 %v915
      %v1020 = vunpack.c.l.b16 %v916
      %v1021 = vunpack.c.l.b16 %v917
      %v1022 = vunpack.c.l.b16 %v918
      %v1023 = vunpack.c.l.b16 %v919
      %v1024 = vunpack.c.l.b16 %v920
      %v1025 = vunpack.c.l.b16 %v921
      %v1026 = vunpack.c.l.b16 %v922
      %v1027 = vunpack.c.l.b16 %v923
      %v1028 = vunpack.c.l.b16 %v924
      %v1029 = vunpack.c.l.b16 %v925
      %v1030 = vunpack.c.l.b16 %v926
      %v1031 = vunpack.c.l.b16 %v927
      %v1032 = vunpack.c.l.b16 %v928
      %v1033 = vunpack.c.l.b16 %v929
      %v1034 = vunpack.c.l.b16 %v930
      %v1035 = vunpack.c.l.b16 %v931
      %v1036 = vunpack.c.l.b16 %v932
      %v1037 = vunpack.c.l.b16 %v933
      %v1038 = vunpack.c.l.b16 %v934
      %v1039 = vunpack.c.l.b16 %v935
      %v1040 = vunpack.c.l.b16 %v936
      %v1041 = vunpack.c.l.b16 %v937
      %v1042 = vunpack.c.l.b16 %v938
      %v1043 = vunpack.c.l.b16 %v939
      %v1044 = vunpack.c.l.b16 %v940
      %v1045 = vunpack.c.l.b16 %v941
      %v1046 = vunpack.c.l.b16 %v942
      %v1047 = vunpack.c.l.b16 %v943
      %v1048 = vunpack.c.l.b16 %v944
      %v1049 = vunpack.c.l.b16 %v945
      %v1050 = vunpack.c.l.b16 %v946
      %v1051 = vunpack.c.l.b16 %v947
      %v1052 = vunpack.c.l.b16 %v948
      %v1053 = vunpack.c.l.b16 %v949
      %v1054 = vunpack.c.l.b16 %v950
      %v1055 = vunpack.c.l.b16 %v951
      %v1056 = vunpack.c.l.b16 %v952
      %v1057 = vunpack.c.l.b16 %v953
      %v1058 = vunpack.c.l.b16 %v954
      %v1059 = vunpack.c.l.b16 %v955
      %v1060 = vunpack.c.l.b16 %v956
      %v1061 = vunpack.c.l.b16 %v957
      %v1062 = vunpack.c.l.b16 %v958
      %v1063 = vunpack.c.l.b16 %v959
      %v1064 = vunpack.c.l.b16 %v960
      %v1065 = vpack.c.b16 %v1018, %v1017
      %v1066 = vpack.c.b16 %v1020, %v1019
      %v1067 = vpack.c.b16 %v1022, %v1021
      %v1068 = vpack.c.b16 %v1024, %v1023
      %v1069 = vpack.c.b16 %v1026, %v1025
      %v1070 = vpack.c.b16 %v1028, %v1027
      %v1071 = vpack.c.b16 %v1030, %v1029
      %v1072 = vpack.c.b16 %v1032, %v1031
      %v1073 = vpack.c.b16 %v1034, %v1033
      %v1074 = vpack.c.b16 %v1036, %v1035
      %v1075 = vpack.c.b16 %v1038, %v1037
      %v1076 = vpack.c.b16 %v1040, %v1039
      %v1077 = vpack.c.b16 %v1042, %v1041
      %v1078 = vpack.c.b16 %v1044, %v1043
      %v1079 = vpack.c.b16 %v1046, %v1045
      %v1080 = vpack.c.b16 %v1048, %v1047
      %v1081 = vpack.c.b16 %v1050, %v1049
      %v1082 = vpack.c.b16 %v1052, %v1051
      %v1083 = vpack.c.b16 %v1054, %v1053
      %v1084 = vpack.c.b16 %v1056, %v1055
      %v1085 = vpack.c.b16 %v1058, %v1057
      %v1086 = vpack.c.b16 %v1060, %v1059
      %v1087 = vpack.c.b16 %v1062, %v1061
      %v1088 = vpack.c.b16 %v1064, %v1063
      %1113 = vmatprep.subr.bf16.mxu0 0
      %1114 = vmatpush1.bf16.msra.mxu0 %v1065
      %1115 = vmatprep.subr.bf16.mxu0 0
      %1116 = vmatpush1.bf16.msra.mxu0 %v1066
      %1117 = vmatprep.subr.bf16.mxu0 0
      %1118 = vmatpush1.bf16.msra.mxu0 %v1067
      %1119 = vmatprep.subr.bf16.mxu0 0
      %1120 = vmatpush1.bf16.msra.mxu0 %v1068
      %1121 = vmatprep.subr.bf16.mxu0 0
      %1122 = vmatpush1.bf16.msra.mxu0 %v1069
      %1123 = vmatprep.subr.bf16.mxu0 0
      %1124 = vmatpush1.bf16.msra.mxu0 %v1070
      %1125 = vmatprep.subr.bf16.mxu0 0
      %1126 = vmatpush1.bf16.msra.mxu0 %v1071
      %1127 = vmatprep.subr.bf16.mxu0 0
      %1128 = vmatpush1.bf16.msra.mxu0 %v1072
      %1129 = vmatprep.subr.bf16.mxu0 0
      %1130 = vmatpush1.bf16.msra.mxu0 %v1073
      %1131 = vmatprep.subr.bf16.mxu0 0
      %1132 = vmatpush1.bf16.msra.mxu0 %v1074
      %1133 = vmatprep.subr.bf16.mxu0 0
      %1134 = vmatpush1.bf16.msra.mxu0 %v1075
      %1135 = vmatprep.subr.bf16.mxu0 0
      %1136 = vmatpush1.bf16.msra.mxu0 %v1076
      %1137 = vmatprep.subr.bf16.mxu0 0
      %1138 = vmatpush1.bf16.msra.mxu0 %v1077
      %1139 = vmatprep.subr.bf16.mxu0 0
      %1140 = vmatpush1.bf16.msra.mxu0 %v1078
      %1141 = vmatprep.subr.bf16.mxu0 0
      %1142 = vmatpush1.bf16.msra.mxu0 %v1079
      %1143 = vmatprep.subr.bf16.mxu0 0
      %1144 = vmatpush1.bf16.msra.mxu0 %v1080
      %1145 = vmatprep.mubr.bf16.mxu0 %v910
      %1146 = vmatmul.mubr.bf16.gmra.mrb[0].mxu0 %v909
      %v1147 = vpop.f32.mrb[0].mxu0
      %v1148 = vadd.f32 %v967, %v1147
      %v1149 = vpop.f32.mrb[0].mxu0
      %v1150 = vpop.f32.mrb[0].mxu0
      %v1151 = vadd.f32 %v967, %v1150
      %v1152 = vpop.f32.mrb[0].mxu0
      %1153 = vdwg.mxu0
      %1154 = vmatprep.subr.bf16.mxu0 0
      %1155 = vmatpush1.bf16.msra.mxu0 %v1081
      %1156 = vmatprep.subr.bf16.mxu0 0
      %1157 = vmatpush1.bf16.msra.mxu0 %v1082
      %1158 = vmatprep.subr.bf16.mxu0 0
      %1159 = vmatpush1.bf16.msra.mxu0 %v1083
      %1160 = vmatprep.subr.bf16.mxu0 0
      %1161 = vmatpush1.bf16.msra.mxu0 %v1084
      %1162 = vmatprep.subr.bf16.mxu0 0
      %1163 = vmatpush1.bf16.msra.mxu0 %v1085
      %1164 = vmatprep.subr.bf16.mxu0 0
      %1165 = vmatpush1.bf16.msra.mxu0 %v1086
      %1166 = vmatprep.subr.bf16.mxu0 0
      %1167 = vmatpush1.bf16.msra.mxu0 %v1087
      %1168 = vmatprep.subr.bf16.mxu0 0
      %1169 = vmatpush1.bf16.msra.mxu0 %v1088
      %1170 = vmatprep.subr.bf16.mxu0 0
      %1171 = vmatpush1.bf16.msra.mxu0 0
      %1172 = vmatprep.subr.bf16.mxu0 0
      %1173 = vmatpush1.bf16.msra.mxu0 0
      %1174 = vmatprep.subr.bf16.mxu0 0
      %1175 = vmatpush1.bf16.msra.mxu0 0
      %1176 = vmatprep.subr.bf16.mxu0 0
      %1177 = vmatpush1.bf16.msra.mxu0 0
      %1178 = vmatprep.subr.bf16.mxu0 0
      %1179 = vmatpush1.bf16.msra.mxu0 0
      %1180 = vmatprep.subr.bf16.mxu0 0
      %1181 = vmatpush1.bf16.msra.mxu0 0
      %1182 = vmatprep.subr.bf16.mxu0 0
      %1183 = vmatpush1.bf16.msra.mxu0 0
      %1184 = vmatprep.subr.bf16.mxu0 0
      %1185 = vmatpush1.bf16.msra.mxu0 0
      %1186 = vmatprep.mubr.bf16.mxu0 0
      %1187 = vmatmul.mubr.bf16.gmra.mrb[0].mxu0 %v911
      %v1188 = vpop.f32.mrb[0].mxu0
      %v1189 = vadd.f32 %v1148, %v1188
      %v1190 = vpop.f32.mrb[0].mxu0
      %v1191 = vpop.f32.mrb[0].mxu0
      %v1192 = vadd.f32 %v1151, %v1191
      %v1193 = vpop.f32.mrb[0].mxu0
      %1194 = vdwg.mxu0
      %v1195 = vadd.f32 %v1189, %v371
      %v1196 = vadd.f32 %v1192, %v372
      %v1197 = vmax.f32 %v1195, 0.0
      %v1198 = vmax.f32 %v1196, 0.0
      %v1199 = vpack.c.bf16 %v783, %v782
      %v1200 = vld [vmem:[%s6] sm:$0xf]
      %v1201 = vld [vmem:[%s6 + $0x4] sm:$0xf]
      %v1202 = vld [vmem:[%s6 + $0x8] sm:$0xf]
      %v1203 = vld [vmem:[%s6 + $0xc] sm:$0xf]
      %v1204 = vld [vmem:[%s6 + $0x10] sm:$0xf]
      %v1205 = vld [vmem:[%s6 + $0x14] sm:$0xf]
      %v1206 = vld [vmem:[%s6 + $0x18] sm:$0xf]
      %v1207 = vld [vmem:[%s6 + $0x1c] sm:$0xf]
      %v1208 = vld [vmem:[%s6 + $0x20] sm:$0xf]
      %v1209 = vld [vmem:[%s6 + $0x24] sm:$0xf]
      %v1210 = vld [vmem:[%s6 + $0x28] sm:$0xf]
      %v1211 = vld [vmem:[%s6 + $0x2c] sm:$0xf]
      %v1212 = vld [vmem:[%s6 + $0x30] sm:$0xf]
      %v1213 = vld [vmem:[%s6 + $0x34] sm:$0xf]
      %v1214 = vld [vmem:[%s6 + $0x38] sm:$0xf]
      %v1215 = vld [vmem:[%s6 + $0x3c] sm:$0xf]
      %v1216 = vld [vmem:[%s7] sm:$0x1]
      %v1218 = vlaneseq
      %v1219 = vshrl.u32 %v1218, 7
      %v1220 = vsub.s32 0, %v1219
      %v1221 = vrot.slane %v1216, %v1220
      %v1239 = vunpack.c.l.b16 %v1200
      %v1240 = vunpack.c.l.b16 %v1201
      %v1241 = vunpack.c.l.b16 %v1202
      %v1242 = vunpack.c.l.b16 %v1203
      %v1243 = vunpack.c.l.b16 %v1204
      %v1244 = vunpack.c.l.b16 %v1205
      %v1245 = vunpack.c.l.b16 %v1206
      %v1246 = vunpack.c.l.b16 %v1207
      %v1247 = vunpack.c.l.b16 %v1208
      %v1248 = vunpack.c.l.b16 %v1209
      %v1249 = vunpack.c.l.b16 %v1210
      %v1250 = vunpack.c.l.b16 %v1211
      %v1251 = vunpack.c.l.b16 %v1212
      %v1252 = vunpack.c.l.b16 %v1213
      %v1253 = vunpack.c.l.b16 %v1214
      %v1254 = vunpack.c.l.b16 %v1215
      %v1255 = vpack.c.b16 %v1240, %v1239
      %v1256 = vpack.c.b16 %v1242, %v1241
      %v1257 = vpack.c.b16 %v1244, %v1243
      %v1258 = vpack.c.b16 %v1246, %v1245
      %v1259 = vpack.c.b16 %v1248, %v1247
      %v1260 = vpack.c.b16 %v1250, %v1249
      %v1261 = vpack.c.b16 %v1252, %v1251
      %v1262 = vpack.c.b16 %v1254, %v1253
      %1271 = vmatprep.subr.bf16.mxu0 0
      %1272 = vmatpush1.bf16.msra.mxu0 %v1255
      %1273 = vmatprep.subr.bf16.mxu0 0
      %1274 = vmatpush1.bf16.msra.mxu0 %v1256
      %1275 = vmatprep.subr.bf16.mxu0 0
      %1276 = vmatpush1.bf16.msra.mxu0 %v1257
      %1277 = vmatprep.subr.bf16.mxu0 0
      %1278 = vmatpush1.bf16.msra.mxu0 %v1258
      %1279 = vmatprep.subr.bf16.mxu0 0
      %1280 = vmatpush1.bf16.msra.mxu0 %v1259
      %1281 = vmatprep.subr.bf16.mxu0 0
      %1282 = vmatpush1.bf16.msra.mxu0 %v1260
      %1283 = vmatprep.subr.bf16.mxu0 0
      %1284 = vmatpush1.bf16.msra.mxu0 %v1261
      %1285 = vmatprep.subr.bf16.mxu0 0
      %1286 = vmatpush1.bf16.msra.mxu0 %v1262
      %1287 = vmatprep.subr.bf16.mxu0 0
      %1288 = vmatpush1.bf16.msra.mxu0 0
      %1289 = vmatprep.subr.bf16.mxu0 0
      %1290 = vmatpush1.bf16.msra.mxu0 0
      %1291 = vmatprep.subr.bf16.mxu0 0
      %1292 = vmatpush1.bf16.msra.mxu0 0
      %1293 = vmatprep.subr.bf16.mxu0 0
      %1294 = vmatpush1.bf16.msra.mxu0 0
      %1295 = vmatprep.subr.bf16.mxu0 0
      %1296 = vmatpush1.bf16.msra.mxu0 0
      %1297 = vmatprep.subr.bf16.mxu0 0
      %1298 = vmatpush1.bf16.msra.mxu0 0
      %1299 = vmatprep.subr.bf16.mxu0 0
      %1300 = vmatpush1.bf16.msra.mxu0 0
      %1301 = vmatprep.subr.bf16.mxu0 0
      %1302 = vmatpush1.bf16.msra.mxu0 0
      %1303 = vmatprep.mubr.bf16.mxu0 0
      %1304 = vmatmul.mubr.bf16.gmra.mrb[0].mxu0 %v1199
      %v1305 = vpop.f32.mrb[0].mxu0
      %v1306 = vadd.f32 %v1221, %v1305
      %v1307 = vpop.f32.mrb[0].mxu0
      %v1308 = vpop.f32.mrb[0].mxu0
      %v1309 = vadd.f32 %v1221, %v1308
      %v1310 = vpop.f32.mrb[0].mxu0
      %1311 = vdwg.mxu0
      %v1312 = vpack.c.bf16 %v1198, %v1197
      %s1313 = scalar_lea.vmem %s6, 128
      %v1314 = vld [vmem:[%s1313] sm:$0xf]
      %v1315 = vld [vmem:[%s1313 + $0x4] sm:$0xf]
      %v1316 = vld [vmem:[%s1313 + $0x8] sm:$0xf]
      %v1317 = vld [vmem:[%s1313 + $0xc] sm:$0xf]
      %v1318 = vld [vmem:[%s1313 + $0x10] sm:$0xf]
      %v1319 = vld [vmem:[%s1313 + $0x14] sm:$0xf]
      %v1320 = vld [vmem:[%s1313 + $0x18] sm:$0xf]
      %v1321 = vld [vmem:[%s1313 + $0x1c] sm:$0xf]
      %v1322 = vld [vmem:[%s1313 + $0x20] sm:$0xf]
      %v1323 = vld [vmem:[%s1313 + $0x24] sm:$0xf]
      %v1324 = vld [vmem:[%s1313 + $0x28] sm:$0xf]
      %v1325 = vld [vmem:[%s1313 + $0x2c] sm:$0xf]
      %v1326 = vld [vmem:[%s1313 + $0x30] sm:$0xf]
      %v1327 = vld [vmem:[%s1313 + $0x34] sm:$0xf]
      %v1328 = vld [vmem:[%s1313 + $0x38] sm:$0xf]
      %v1329 = vld [vmem:[%s1313 + $0x3c] sm:$0xf]
      %s1330 = scalar_lea.vmem %s7, 2
      %v1331 = vld [vmem:[%s1330] sm:$0x1]
      %v1333 = vlaneseq
      %v1334 = vshrl.u32 %v1333, 7
      %v1335 = vsub.s32 0, %v1334
      %v1336 = vrot.slane %v1331, %v1335
      %v1354 = vunpack.c.l.b16 %v1314
      %v1355 = vunpack.c.l.b16 %v1315
      %v1356 = vunpack.c.l.b16 %v1316
      %v1357 = vunpack.c.l.b16 %v1317
      %v1358 = vunpack.c.l.b16 %v1318
      %v1359 = vunpack.c.l.b16 %v1319
      %v1360 = vunpack.c.l.b16 %v1320
      %v1361 = vunpack.c.l.b16 %v1321
      %v1362 = vunpack.c.l.b16 %v1322
      %v1363 = vunpack.c.l.b16 %v1323
      %v1364 = vunpack.c.l.b16 %v1324
      %v1365 = vunpack.c.l.b16 %v1325
      %v1366 = vunpack.c.l.b16 %v1326
      %v1367 = vunpack.c.l.b16 %v1327
      %v1368 = vunpack.c.l.b16 %v1328
      %v1369 = vunpack.c.l.b16 %v1329
      %v1370 = vpack.c.b16 %v1355, %v1354
      %v1371 = vpack.c.b16 %v1357, %v1356
      %v1372 = vpack.c.b16 %v1359, %v1358
      %v1373 = vpack.c.b16 %v1361, %v1360
      %v1374 = vpack.c.b16 %v1363, %v1362
      %v1375 = vpack.c.b16 %v1365, %v1364
      %v1376 = vpack.c.b16 %v1367, %v1366
      %v1377 = vpack.c.b16 %v1369, %v1368
      %1386 = vmatprep.subr.bf16.mxu0 0
      %1387 = vmatpush1.bf16.msra.mxu0 %v1370
      %1388 = vmatprep.subr.bf16.mxu0 0
      %1389 = vmatpush1.bf16.msra.mxu0 %v1371
      %1390 = vmatprep.subr.bf16.mxu0 0
      %1391 = vmatpush1.bf16.msra.mxu0 %v1372
      %1392 = vmatprep.subr.bf16.mxu0 0
      %1393 = vmatpush1.bf16.msra.mxu0 %v1373
      %1394 = vmatprep.subr.bf16.mxu0 0
      %1395 = vmatpush1.bf16.msra.mxu0 %v1374
      %1396 = vmatprep.subr.bf16.mxu0 0
      %1397 = vmatpush1.bf16.msra.mxu0 %v1375
      %1398 = vmatprep.subr.bf16.mxu0 0
      %1399 = vmatpush1.bf16.msra.mxu0 %v1376
      %1400 = vmatprep.subr.bf16.mxu0 0
      %1401 = vmatpush1.bf16.msra.mxu0 %v1377
      %1402 = vmatprep.subr.bf16.mxu0 0
      %1403 = vmatpush1.bf16.msra.mxu0 0
      %1404 = vmatprep.subr.bf16.mxu0 0
      %1405 = vmatpush1.bf16.msra.mxu0 0
      %1406 = vmatprep.subr.bf16.mxu0 0
      %1407 = vmatpush1.bf16.msra.mxu0 0
      %1408 = vmatprep.subr.bf16.mxu0 0
      %1409 = vmatpush1.bf16.msra.mxu0 0
      %1410 = vmatprep.subr.bf16.mxu0 0
      %1411 = vmatpush1.bf16.msra.mxu0 0
      %1412 = vmatprep.subr.bf16.mxu0 0
      %1413 = vmatpush1.bf16.msra.mxu0 0
      %1414 = vmatprep.subr.bf16.mxu0 0
      %1415 = vmatpush1.bf16.msra.mxu0 0
      %1416 = vmatprep.subr.bf16.mxu0 0
      %1417 = vmatpush1.bf16.msra.mxu0 0
      %1418 = vmatprep.mubr.bf16.mxu0 0
      %1419 = vmatmul.mubr.bf16.gmra.mrb[0].mxu0 %v1312
      %v1420 = vpop.f32.mrb[0].mxu0
      %v1421 = vadd.f32 %v1336, %v1420
      %v1422 = vpop.f32.mrb[0].mxu0
      %v1423 = vpop.f32.mrb[0].mxu0
      %v1424 = vadd.f32 %v1336, %v1423
      %v1425 = vpop.f32.mrb[0].mxu0
      %1426 = vdwg.mxu0
      %v1427 = vadd.f32 %v782, %v1421
      %v1428 = vadd.f32 %v783, %v1424
      %v1429 = vadd.f32 %v1197, %v1306
      %v1430 = vadd.f32 %v1198, %v1309
      %v1431 = vpack.c.bf16 %v1428, %v1427
      %s1432 = scalar_lea.vmem %s2, 64
      %v1433 = vld [vmem:[%s1432] sm:$0xf]
      %v1434 = vld [vmem:[%s1432 + $0x4] sm:$0xf]
      %v1435 = vld [vmem:[%s1432 + $0x8] sm:$0xf]
      %v1436 = vld [vmem:[%s1432 + $0xc] sm:$0xf]
      %v1437 = vld [vmem:[%s1432 + $0x10] sm:$0xf]
      %v1438 = vld [vmem:[%s1432 + $0x14] sm:$0xf]
      %v1439 = vld [vmem:[%s1432 + $0x18] sm:$0xf]
      %v1440 = vld [vmem:[%s1432 + $0x1c] sm:$0xf]
      %v1441 = vld [vmem:[%s1432 + $0x20] sm:$0xf]
      %v1442 = vld [vmem:[%s1432 + $0x24] sm:$0xf]
      %v1443 = vld [vmem:[%s1432 + $0x28] sm:$0xf]
      %v1444 = vld [vmem:[%s1432 + $0x2c] sm:$0xf]
      %v1445 = vld [vmem:[%s1432 + $0x30] sm:$0xf]
      %v1446 = vld [vmem:[%s1432 + $0x34] sm:$0xf]
      %v1447 = vld [vmem:[%s1432 + $0x38] sm:$0xf]
      %v1448 = vld [vmem:[%s1432 + $0x3c] sm:$0xf]
      %s1449 = scalar_lea.vmem %s3, 1
      %v1450 = vld [vmem:[%s1449] sm:$0x1]
      %v1452 = vlaneseq
      %v1453 = vshrl.u32 %v1452, 7
      %v1454 = vsub.s32 0, %v1453
      %v1455 = vrot.slane %v1450, %v1454
      %v1473 = vunpack.c.l.b16 %v1433
      %v1474 = vunpack.c.l.b16 %v1434
      %v1475 = vunpack.c.l.b16 %v1435
      %v1476 = vunpack.c.l.b16 %v1436
      %v1477 = vunpack.c.l.b16 %v1437
      %v1478 = vunpack.c.l.b16 %v1438
      %v1479 = vunpack.c.l.b16 %v1439
      %v1480 = vunpack.c.l.b16 %v1440
      %v1481 = vunpack.c.l.b16 %v1441
      %v1482 = vunpack.c.l.b16 %v1442
      %v1483 = vunpack.c.l.b16 %v1443
      %v1484 = vunpack.c.l.b16 %v1444
      %v1485 = vunpack.c.l.b16 %v1445
      %v1486 = vunpack.c.l.b16 %v1446
      %v1487 = vunpack.c.l.b16 %v1447
      %v1488 = vunpack.c.l.b16 %v1448
      %v1489 = vpack.c.b16 %v1474, %v1473
      %v1490 = vpack.c.b16 %v1476, %v1475
      %v1491 = vpack.c.b16 %v1478, %v1477
      %v1492 = vpack.c.b16 %v1480, %v1479
      %v1493 = vpack.c.b16 %v1482, %v1481
      %v1494 = vpack.c.b16 %v1484, %v1483
      %v1495 = vpack.c.b16 %v1486, %v1485
      %v1496 = vpack.c.b16 %v1488, %v1487
      %1505 = vmatprep.subr.bf16.mxu0 0
      %1506 = vmatpush1.bf16.msra.mxu0 %v1489
      %1507 = vmatprep.subr.bf16.mxu0 0
      %1508 = vmatpush1.bf16.msra.mxu0 %v1490
      %1509 = vmatprep.subr.bf16.mxu0 0
      %1510 = vmatpush1.bf16.msra.mxu0 %v1491
      %1511 = vmatprep.subr.bf16.mxu0 0
      %1512 = vmatpush1.bf16.msra.mxu0 %v1492
      %1513 = vmatprep.subr.bf16.mxu0 0
      %1514 = vmatpush1.bf16.msra.mxu0 %v1493
      %1515 = vmatprep.subr.bf16.mxu0 0
      %1516 = vmatpush1.bf16.msra.mxu0 %v1494
      %1517 = vmatprep.subr.bf16.mxu0 0
      %1518 = vmatpush1.bf16.msra.mxu0 %v1495
      %1519 = vmatprep.subr.bf16.mxu0 0
      %1520 = vmatpush1.bf16.msra.mxu0 %v1496
      %1521 = vmatprep.subr.bf16.mxu0 0
      %1522 = vmatpush1.bf16.msra.mxu0 0
      %1523 = vmatprep.subr.bf16.mxu0 0
      %1524 = vmatpush1.bf16.msra.mxu0 0
      %1525 = vmatprep.subr.bf16.mxu0 0
      %1526 = vmatpush1.bf16.msra.mxu0 0
      %1527 = vmatprep.subr.bf16.mxu0 0
      %1528 = vmatpush1.bf16.msra.mxu0 0
      %1529 = vmatprep.subr.bf16.mxu0 0
      %1530 = vmatpush1.bf16.msra.mxu0 0
      %1531 = vmatprep.subr.bf16.mxu0 0
      %1532 = vmatpush1.bf16.msra.mxu0 0
      %1533 = vmatprep.subr.bf16.mxu0 0
      %1534 = vmatpush1.bf16.msra.mxu0 0
      %1535 = vmatprep.subr.bf16.mxu0 0
      %1536 = vmatpush1.bf16.msra.mxu0 0
      %1537 = vmatprep.mubr.bf16.mxu0 0
      %1538 = vmatmul.mubr.bf16.gmra.mrb[0].mxu0 %v1431
      %v1539 = vpop.f32.mrb[0].mxu0
      %v1540 = vadd.f32 %v1455, %v1539
      %v1541 = vpop.f32.mrb[0].mxu0
      %v1542 = vpop.f32.mrb[0].mxu0
      %v1543 = vadd.f32 %v1455, %v1542
      %v1544 = vpop.f32.mrb[0].mxu0
      %1545 = vdwg.mxu0
      %v1546 = vmax.f32 %v1540, 0.0
      %v1547 = vmax.f32 %v1543, 0.0
      %1548 = vst [vmem:[#allocation2 + $0x8] sm:$0xff] %v1546
      %1549 = vst [vmem:[#allocation2 + $0x10] sm:$0xff] %v1547
      %v1550 = vld [vmem:[#allocation2 + $0x7] sm:$0xff]
      %v1551 = vld [vmem:[#allocation2 + $0xf] sm:$0xff]
      %v1552 = vld [vmem:[#allocation2 + $0x8] sm:$0xff]
      %v1553 = vld [vmem:[#allocation2 + $0x10] sm:$0xff]
      %v1554 = vld [vmem:[#allocation2 + $0x9] sm:$0xff]
      %v1555 = vld [vmem:[#allocation2 + $0x11] sm:$0xff]
      %v1556 = vpack.c.bf16 %v1551, %v1550
      %v1557 = vpack.c.bf16 %v1553, %v1552
      %v1558 = vpack.c.bf16 %v1555, %v1554
      %s1559 = scalar_lea.vmem %s4, 192
      %v1560 = vld [vmem:[%s1559] sm:$0xf]
      %v1561 = vld [vmem:[%s1559 + $0x4] sm:$0xf]
      %v1562 = vld [vmem:[%s1559 + $0x8] sm:$0xf]
      %v1563 = vld [vmem:[%s1559 + $0xc] sm:$0xf]
      %v1564 = vld [vmem:[%s1559 + $0x10] sm:$0xf]
      %v1565 = vld [vmem:[%s1559 + $0x14] sm:$0xf]
      %v1566 = vld [vmem:[%s1559 + $0x18] sm:$0xf]
      %v1567 = vld [vmem:[%s1559 + $0x1c] sm:$0xf]
      %v1568 = vld [vmem:[%s1559 + $0x20] sm:$0xf]
      %v1569 = vld [vmem:[%s1559 + $0x24] sm:$0xf]
      %v1570 = vld [vmem:[%s1559 + $0x28] sm:$0xf]
      %v1571 = vld [vmem:[%s1559 + $0x2c] sm:$0xf]
      %v1572 = vld [vmem:[%s1559 + $0x30] sm:$0xf]
      %v1573 = vld [vmem:[%s1559 + $0x34] sm:$0xf]
      %v1574 = vld [vmem:[%s1559 + $0x38] sm:$0xf]
      %v1575 = vld [vmem:[%s1559 + $0x3c] sm:$0xf]
      %v1576 = vld [vmem:[%s1559 + $0x40] sm:$0xf]
      %v1577 = vld [vmem:[%s1559 + $0x44] sm:$0xf]
      %v1578 = vld [vmem:[%s1559 + $0x48] sm:$0xf]
      %v1579 = vld [vmem:[%s1559 + $0x4c] sm:$0xf]
      %v1580 = vld [vmem:[%s1559 + $0x50] sm:$0xf]
      %v1581 = vld [vmem:[%s1559 + $0x54] sm:$0xf]
      %v1582 = vld [vmem:[%s1559 + $0x58] sm:$0xf]
      %v1583 = vld [vmem:[%s1559 + $0x5c] sm:$0xf]
      %v1584 = vld [vmem:[%s1559 + $0x60] sm:$0xf]
      %v1585 = vld [vmem:[%s1559 + $0x64] sm:$0xf]
      %v1586 = vld [vmem:[%s1559 + $0x68] sm:$0xf]
      %v1587 = vld [vmem:[%s1559 + $0x6c] sm:$0xf]
      %v1588 = vld [vmem:[%s1559 + $0x70] sm:$0xf]
      %v1589 = vld [vmem:[%s1559 + $0x74] sm:$0xf]
      %v1590 = vld [vmem:[%s1559 + $0x78] sm:$0xf]
      %v1591 = vld [vmem:[%s1559 + $0x7c] sm:$0xf]
      %v1592 = vld [vmem:[%s1559 + $0x80] sm:$0xf]
      %v1593 = vld [vmem:[%s1559 + $0x84] sm:$0xf]
      %v1594 = vld [vmem:[%s1559 + $0x88] sm:$0xf]
      %v1595 = vld [vmem:[%s1559 + $0x8c] sm:$0xf]
      %v1596 = vld [vmem:[%s1559 + $0x90] sm:$0xf]
      %v1597 = vld [vmem:[%s1559 + $0x94] sm:$0xf]
      %v1598 = vld [vmem:[%s1559 + $0x98] sm:$0xf]
      %v1599 = vld [vmem:[%s1559 + $0x9c] sm:$0xf]
      %v1600 = vld [vmem:[%s1559 + $0xa0] sm:$0xf]
      %v1601 = vld [vmem:[%s1559 + $0xa4] sm:$0xf]
      %v1602 = vld [vmem:[%s1559 + $0xa8] sm:$0xf]
      %v1603 = vld [vmem:[%s1559 + $0xac] sm:$0xf]
      %v1604 = vld [vmem:[%s1559 + $0xb0] sm:$0xf]
      %v1605 = vld [vmem:[%s1559 + $0xb4] sm:$0xf]
      %v1606 = vld [vmem:[%s1559 + $0xb8] sm:$0xf]
      %v1607 = vld [vmem:[%s1559 + $0xbc] sm:$0xf]
      %s1608 = scalar_lea.vmem %s5, 1
      %v1609 = vld [vmem:[%s1608] sm:$0x1]
      %v1611 = vlaneseq
      %v1612 = vshrl.u32 %v1611, 7
      %v1613 = vsub.s32 0, %v1612
      %v1614 = vrot.slane %v1609, %v1613
      %v1664 = vunpack.c.l.b16 %v1560
      %v1665 = vunpack.c.l.b16 %v1561
      %v1666 = vunpack.c.l.b16 %v1562
      %v1667 = vunpack.c.l.b16 %v1563
      %v1668 = vunpack.c.l.b16 %v1564
      %v1669 = vunpack.c.l.b16 %v1565
      %v1670 = vunpack.c.l.b16 %v1566
      %v1671 = vunpack.c.l.b16 %v1567
      %v1672 = vunpack.c.l.b16 %v1568
      %v1673 = vunpack.c.l.b16 %v1569
      %v1674 = vunpack.c.l.b16 %v1570
      %v1675 = vunpack.c.l.b16 %v1571
      %v1676 = vunpack.c.l.b16 %v1572
      %v1677 = vunpack.c.l.b16 %v1573
      %v1678 = vunpack.c.l.b16 %v1574
      %v1679 = vunpack.c.l.b16 %v1575
      %v1680 = vunpack.c.l.b16 %v1576
      %v1681 = vunpack.c.l.b16 %v1577
      %v1682 = vunpack.c.l.b16 %v1578
      %v1683 = vunpack.c.l.b16 %v1579
      %v1684 = vunpack.c.l.b16 %v1580
      %v1685 = vunpack.c.l.b16 %v1581
      %v1686 = vunpack.c.l.b16 %v1582
      %v1687 = vunpack.c.l.b16 %v1583
      %v1688 = vunpack.c.l.b16 %v1584
      %v1689 = vunpack.c.l.b16 %v1585
      %v1690 = vunpack.c.l.b16 %v1586
      %v1691 = vunpack.c.l.b16 %v1587
      %v1692 = vunpack.c.l.b16 %v1588
      %v1693 = vunpack.c.l.b16 %v1589
      %v1694 = vunpack.c.l.b16 %v1590
      %v1695 = vunpack.c.l.b16 %v1591
      %v1696 = vunpack.c.l.b16 %v1592
      %v1697 = vunpack.c.l.b16 %v1593
      %v1698 = vunpack.c.l.b16 %v1594
      %v1699 = vunpack.c.l.b16 %v1595
      %v1700 = vunpack.c.l.b16 %v1596
      %v1701 = vunpack.c.l.b16 %v1597
      %v1702 = vunpack.c.l.b16 %v1598
      %v1703 = vunpack.c.l.b16 %v1599
      %v1704 = vunpack.c.l.b16 %v1600
      %v1705 = vunpack.c.l.b16 %v1601
      %v1706 = vunpack.c.l.b16 %v1602
      %v1707 = vunpack.c.l.b16 %v1603
      %v1708 = vunpack.c.l.b16 %v1604
      %v1709 = vunpack.c.l.b16 %v1605
      %v1710 = vunpack.c.l.b16 %v1606
      %v1711 = vunpack.c.l.b16 %v1607
      %v1712 = vpack.c.b16 %v1665, %v1664
      %v1713 = vpack.c.b16 %v1667, %v1666
      %v1714 = vpack.c.b16 %v1669, %v1668
      %v1715 = vpack.c.b16 %v1671, %v1670
      %v1716 = vpack.c.b16 %v1673, %v1672
      %v1717 = vpack.c.b16 %v1675, %v1674
      %v1718 = vpack.c.b16 %v1677, %v1676
      %v1719 = vpack.c.b16 %v1679, %v1678
      %v1720 = vpack.c.b16 %v1681, %v1680
      %v1721 = vpack.c.b16 %v1683, %v1682
      %v1722 = vpack.c.b16 %v1685, %v1684
      %v1723 = vpack.c.b16 %v1687, %v1686
      %v1724 = vpack.c.b16 %v1689, %v1688
      %v1725 = vpack.c.b16 %v1691, %v1690
      %v1726 = vpack.c.b16 %v1693, %v1692
      %v1727 = vpack.c.b16 %v1695, %v1694
      %v1728 = vpack.c.b16 %v1697, %v1696
      %v1729 = vpack.c.b16 %v1699, %v1698
      %v1730 = vpack.c.b16 %v1701, %v1700
      %v1731 = vpack.c.b16 %v1703, %v1702
      %v1732 = vpack.c.b16 %v1705, %v1704
      %v1733 = vpack.c.b16 %v1707, %v1706
      %v1734 = vpack.c.b16 %v1709, %v1708
      %v1735 = vpack.c.b16 %v1711, %v1710
      %1760 = vmatprep.subr.bf16.mxu0 0
      %1761 = vmatpush1.bf16.msra.mxu0 %v1712
      %1762 = vmatprep.subr.bf16.mxu0 0
      %1763 = vmatpush1.bf16.msra.mxu0 %v1713
      %1764 = vmatprep.subr.bf16.mxu0 0
      %1765 = vmatpush1.bf16.msra.mxu0 %v1714
      %1766 = vmatprep.subr.bf16.mxu0 0
      %1767 = vmatpush1.bf16.msra.mxu0 %v1715
      %1768 = vmatprep.subr.bf16.mxu0 0
      %1769 = vmatpush1.bf16.msra.mxu0 %v1716
      %1770 = vmatprep.subr.bf16.mxu0 0
      %1771 = vmatpush1.bf16.msra.mxu0 %v1717
      %1772 = vmatprep.subr.bf16.mxu0 0
      %1773 = vmatpush1.bf16.msra.mxu0 %v1718
      %1774 = vmatprep.subr.bf16.mxu0 0
      %1775 = vmatpush1.bf16.msra.mxu0 %v1719
      %1776 = vmatprep.subr.bf16.mxu0 0
      %1777 = vmatpush1.bf16.msra.mxu0 %v1720
      %1778 = vmatprep.subr.bf16.mxu0 0
      %1779 = vmatpush1.bf16.msra.mxu0 %v1721
      %1780 = vmatprep.subr.bf16.mxu0 0
      %1781 = vmatpush1.bf16.msra.mxu0 %v1722
      %1782 = vmatprep.subr.bf16.mxu0 0
      %1783 = vmatpush1.bf16.msra.mxu0 %v1723
      %1784 = vmatprep.subr.bf16.mxu0 0
      %1785 = vmatpush1.bf16.msra.mxu0 %v1724
      %1786 = vmatprep.subr.bf16.mxu0 0
      %1787 = vmatpush1.bf16.msra.mxu0 %v1725
      %1788 = vmatprep.subr.bf16.mxu0 0
      %1789 = vmatpush1.bf16.msra.mxu0 %v1726
      %1790 = vmatprep.subr.bf16.mxu0 0
      %1791 = vmatpush1.bf16.msra.mxu0 %v1727
      %1792 = vmatprep.mubr.bf16.mxu0 %v1557
      %1793 = vmatmul.mubr.bf16.gmra.mrb[0].mxu0 %v1556
      %v1794 = vpop.f32.mrb[0].mxu0
      %v1795 = vadd.f32 %v1614, %v1794
      %v1796 = vpop.f32.mrb[0].mxu0
      %v1797 = vpop.f32.mrb[0].mxu0
      %v1798 = vadd.f32 %v1614, %v1797
      %v1799 = vpop.f32.mrb[0].mxu0
      %1800 = vdwg.mxu0
      %1801 = vmatprep.subr.bf16.mxu0 0
      %1802 = vmatpush1.bf16.msra.mxu0 %v1728
      %1803 = vmatprep.subr.bf16.mxu0 0
      %1804 = vmatpush1.bf16.msra.mxu0 %v1729
      %1805 = vmatprep.subr.bf16.mxu0 0
      %1806 = vmatpush1.bf16.msra.mxu0 %v1730
      %1807 = vmatprep.subr.bf16.mxu0 0
      %1808 = vmatpush1.bf16.msra.mxu0 %v1731
      %1809 = vmatprep.subr.bf16.mxu0 0
      %1810 = vmatpush1.bf16.msra.mxu0 %v1732
      %1811 = vmatprep.subr.bf16.mxu0 0
      %1812 = vmatpush1.bf16.msra.mxu0 %v1733
      %1813 = vmatprep.subr.bf16.mxu0 0
      %1814 = vmatpush1.bf16.msra.mxu0 %v1734
      %1815 = vmatprep.subr.bf16.mxu0 0
      %1816 = vmatpush1.bf16.msra.mxu0 %v1735
      %1817 = vmatprep.subr.bf16.mxu0 0
      %1818 = vmatpush1.bf16.msra.mxu0 0
      %1819 = vmatprep.subr.bf16.mxu0 0
      %1820 = vmatpush1.bf16.msra.mxu0 0
      %1821 = vmatprep.subr.bf16.mxu0 0
      %1822 = vmatpush1.bf16.msra.mxu0 0
      %1823 = vmatprep.subr.bf16.mxu0 0
      %1824 = vmatpush1.bf16.msra.mxu0 0
      %1825 = vmatprep.subr.bf16.mxu0 0
      %1826 = vmatpush1.bf16.msra.mxu0 0
      %1827 = vmatprep.subr.bf16.mxu0 0
      %1828 = vmatpush1.bf16.msra.mxu0 0
      %1829 = vmatprep.subr.bf16.mxu0 0
      %1830 = vmatpush1.bf16.msra.mxu0 0
      %1831 = vmatprep.subr.bf16.mxu0 0
      %1832 = vmatpush1.bf16.msra.mxu0 0
      %1833 = vmatprep.mubr.bf16.mxu0 0
      %1834 = vmatmul.mubr.bf16.gmra.mrb[0].mxu0 %v1558
      %v1835 = vpop.f32.mrb[0].mxu0
      %v1836 = vadd.f32 %v1795, %v1835
      %v1837 = vpop.f32.mrb[0].mxu0
      %v1838 = vpop.f32.mrb[0].mxu0
      %v1839 = vadd.f32 %v1798, %v1838
      %v1840 = vpop.f32.mrb[0].mxu0
      %1841 = vdwg.mxu0
      %v1842 = vadd.f32 %v1836, %v1427
      %v1843 = vadd.f32 %v1839, %v1428
      %v1844 = vmax.f32 %v1842, 0.0
      %v1845 = vmax.f32 %v1843, 0.0
      %v1846 = vpack.c.bf16 %v1430, %v1429
      %s1847 = scalar_lea.vmem %s2, 192
      %v1848 = vld [vmem:[%s1847] sm:$0xf]
      %v1849 = vld [vmem:[%s1847 + $0x4] sm:$0xf]
      %v1850 = vld [vmem:[%s1847 + $0x8] sm:$0xf]
      %v1851 = vld [vmem:[%s1847 + $0xc] sm:$0xf]
      %v1852 = vld [vmem:[%s1847 + $0x10] sm:$0xf]
      %v1853 = vld [vmem:[%s1847 + $0x14] sm:$0xf]
      %v1854 = vld [vmem:[%s1847 + $0x18] sm:$0xf]
      %v1855 = vld [vmem:[%s1847 + $0x1c] sm:$0xf]
      %v1856 = vld [vmem:[%s1847 + $0x20] sm:$0xf]
      %v1857 = vld [vmem:[%s1847 + $0x24] sm:$0xf]
      %v1858 = vld [vmem:[%s1847 + $0x28] sm:$0xf]
      %v1859 = vld [vmem:[%s1847 + $0x2c] sm:$0xf]
      %v1860 = vld [vmem:[%s1847 + $0x30] sm:$0xf]
      %v1861 = vld [vmem:[%s1847 + $0x34] sm:$0xf]
      %v1862 = vld [vmem:[%s1847 + $0x38] sm:$0xf]
      %v1863 = vld [vmem:[%s1847 + $0x3c] sm:$0xf]
      %s1864 = scalar_lea.vmem %s3, 3
      %v1865 = vld [vmem:[%s1864] sm:$0x1]
      %v1867 = vlaneseq
      %v1868 = vshrl.u32 %v1867, 7
      %v1869 = vsub.s32 0, %v1868
      %v1870 = vrot.slane %v1865, %v1869
      %v1888 = vunpack.c.l.b16 %v1848
      %v1889 = vunpack.c.l.b16 %v1849
      %v1890 = vunpack.c.l.b16 %v1850
      %v1891 = vunpack.c.l.b16 %v1851
      %v1892 = vunpack.c.l.b16 %v1852
      %v1893 = vunpack.c.l.b16 %v1853
      %v1894 = vunpack.c.l.b16 %v1854
      %v1895 = vunpack.c.l.b16 %v1855
      %v1896 = vunpack.c.l.b16 %v1856
      %v1897 = vunpack.c.l.b16 %v1857
      %v1898 = vunpack.c.l.b16 %v1858
      %v1899 = vunpack.c.l.b16 %v1859
      %v1900 = vunpack.c.l.b16 %v1860
      %v1901 = vunpack.c.l.b16 %v1861
      %v1902 = vunpack.c.l.b16 %v1862
      %v1903 = vunpack.c.l.b16 %v1863
      %v1904 = vpack.c.b16 %v1889, %v1888
      %v1905 = vpack.c.b16 %v1891, %v1890
      %v1906 = vpack.c.b16 %v1893, %v1892
      %v1907 = vpack.c.b16 %v1895, %v1894
      %v1908 = vpack.c.b16 %v1897, %v1896
      %v1909 = vpack.c.b16 %v1899, %v1898
      %v1910 = vpack.c.b16 %v1901, %v1900
      %v1911 = vpack.c.b16 %v1903, %v1902
      %1920 = vmatprep.subr.bf16.mxu0 0
      %1921 = vmatpush1.bf16.msra.mxu0 %v1904
      %1922 = vmatprep.subr.bf16.mxu0 0
      %1923 = vmatpush1.bf16.msra.mxu0 %v1905
      %1924 = vmatprep.subr.bf16.mxu0 0
      %1925 = vmatpush1.bf16.msra.mxu0 %v1906
      %1926 = vmatprep.subr.bf16.mxu0 0
      %1927 = vmatpush1.bf16.msra.mxu0 %v1907
      %1928 = vmatprep.subr.bf16.mxu0 0
      %1929 = vmatpush1.bf16.msra.mxu0 %v1908
      %1930 = vmatprep.subr.bf16.mxu0 0
      %1931 = vmatpush1.bf16.msra.mxu0 %v1909
      %1932 = vmatprep.subr.bf16.mxu0 0
      %1933 = vmatpush1.bf16.msra.mxu0 %v1910
      %1934 = vmatprep.subr.bf16.mxu0 0
      %1935 = vmatpush1.bf16.msra.mxu0 %v1911
      %1936 = vmatprep.subr.bf16.mxu0 0
      %1937 = vmatpush1.bf16.msra.mxu0 0
      %1938 = vmatprep.subr.bf16.mxu0 0
      %1939 = vmatpush1.bf16.msra.mxu0 0
      %1940 = vmatprep.subr.bf16.mxu0 0
      %1941 = vmatpush1.bf16.msra.mxu0 0
      %1942 = vmatprep.subr.bf16.mxu0 0
      %1943 = vmatpush1.bf16.msra.mxu0 0
      %1944 = vmatprep.subr.bf16.mxu0 0
      %1945 = vmatpush1.bf16.msra.mxu0 0
      %1946 = vmatprep.subr.bf16.mxu0 0
      %1947 = vmatpush1.bf16.msra.mxu0 0
      %1948 = vmatprep.subr.bf16.mxu0 0
      %1949 = vmatpush1.bf16.msra.mxu0 0
      %1950 = vmatprep.subr.bf16.mxu0 0
      %1951 = vmatpush1.bf16.msra.mxu0 0
      %1952 = vmatprep.mubr.bf16.mxu0 0
      %1953 = vmatmul.mubr.bf16.gmra.mrb[0].mxu0 %v1846
      %v1954 = vpop.f32.mrb[0].mxu0
      %v1955 = vadd.f32 %v1870, %v1954
      %v1956 = vpop.f32.mrb[0].mxu0
      %v1957 = vpop.f32.mrb[0].mxu0
      %v1958 = vadd.f32 %v1870, %v1957
      %v1959 = vpop.f32.mrb[0].mxu0
      %1960 = vdwg.mxu0
      %v1961 = vmax.f32 %v1955, 0.0
      %v1962 = vmax.f32 %v1958, 0.0
      %1963 = vst [vmem:[#allocation2 + $0x8] sm:$0xff] %v1961
      %1964 = vst [vmem:[#allocation2 + $0x10] sm:$0xff] %v1962
      %v1965 = vld [vmem:[#allocation2 + $0x7] sm:$0xff]
      %v1966 = vld [vmem:[#allocation2 + $0xf] sm:$0xff]
      %v1967 = vld [vmem:[#allocation2 + $0x8] sm:$0xff]
      %v1968 = vld [vmem:[#allocation2 + $0x10] sm:$0xff]
      %v1969 = vld [vmem:[#allocation2 + $0x9] sm:$0xff]
      %v1970 = vld [vmem:[#allocation2 + $0x11] sm:$0xff]
      %v1971 = vpack.c.bf16 %v1966, %v1965
      %v1972 = vpack.c.bf16 %v1968, %v1967
      %v1973 = vpack.c.bf16 %v1970, %v1969
      %s1974 = scalar_lea.vmem %s4, 576
      %v1975 = vld [vmem:[%s1974] sm:$0xf]
      %v1976 = vld [vmem:[%s1974 + $0x4] sm:$0xf]
      %v1977 = vld [vmem:[%s1974 + $0x8] sm:$0xf]
      %v1978 = vld [vmem:[%s1974 + $0xc] sm:$0xf]
      %v1979 = vld [vmem:[%s1974 + $0x10] sm:$0xf]
      %v1980 = vld [vmem:[%s1974 + $0x14] sm:$0xf]
      %v1981 = vld [vmem:[%s1974 + $0x18] sm:$0xf]
      %v1982 = vld [vmem:[%s1974 + $0x1c] sm:$0xf]
      %v1983 = vld [vmem:[%s1974 + $0x20] sm:$0xf]
      %v1984 = vld [vmem:[%s1974 + $0x24] sm:$0xf]
      %v1985 = vld [vmem:[%s1974 + $0x28] sm:$0xf]
      %v1986 = vld [vmem:[%s1974 + $0x2c] sm:$0xf]
      %v1987 = vld [vmem:[%s1974 + $0x30] sm:$0xf]
      %v1988 = vld [vmem:[%s1974 + $0x34] sm:$0xf]
      %v1989 = vld [vmem:[%s1974 + $0x38] sm:$0xf]
      %v1990 = vld [vmem:[%s1974 + $0x3c] sm:$0xf]
      %v1991 = vld [vmem:[%s1974 + $0x40] sm:$0xf]
      %v1992 = vld [vmem:[%s1974 + $0x44] sm:$0xf]
      %v1993 = vld [vmem:[%s1974 + $0x48] sm:$0xf]
      %v1994 = vld [vmem:[%s1974 + $0x4c] sm:$0xf]
      %v1995 = vld [vmem:[%s1974 + $0x50] sm:$0xf]
      %v1996 = vld [vmem:[%s1974 + $0x54] sm:$0xf]
      %v1997 = vld [vmem:[%s1974 + $0x58] sm:$0xf]
      %v1998 = vld [vmem:[%s1974 + $0x5c] sm:$0xf]
      %v1999 = vld [vmem:[%s1974 + $0x60] sm:$0xf]
      %v2000 = vld [vmem:[%s1974 + $0x64] sm:$0xf]
      %v2001 = vld [vmem:[%s1974 + $0x68] sm:$0xf]
      %v2002 = vld [vmem:[%s1974 + $0x6c] sm:$0xf]
      %v2003 = vld [vmem:[%s1974 + $0x70] sm:$0xf]
      %v2004 = vld [vmem:[%s1974 + $0x74] sm:$0xf]
      %v2005 = vld [vmem:[%s1974 + $0x78] sm:$0xf]
      %v2006 = vld [vmem:[%s1974 + $0x7c] sm:$0xf]
      %v2007 = vld [vmem:[%s1974 + $0x80] sm:$0xf]
      %v2008 = vld [vmem:[%s1974 + $0x84] sm:$0xf]
      %v2009 = vld [vmem:[%s1974 + $0x88] sm:$0xf]
      %v2010 = vld [vmem:[%s1974 + $0x8c] sm:$0xf]
      %v2011 = vld [vmem:[%s1974 + $0x90] sm:$0xf]
      %v2012 = vld [vmem:[%s1974 + $0x94] sm:$0xf]
      %v2013 = vld [vmem:[%s1974 + $0x98] sm:$0xf]
      %v2014 = vld [vmem:[%s1974 + $0x9c] sm:$0xf]
      %v2015 = vld [vmem:[%s1974 + $0xa0] sm:$0xf]
      %v2016 = vld [vmem:[%s1974 + $0xa4] sm:$0xf]
      %v2017 = vld [vmem:[%s1974 + $0xa8] sm:$0xf]
      %v2018 = vld [vmem:[%s1974 + $0xac] sm:$0xf]
      %v2019 = vld [vmem:[%s1974 + $0xb0] sm:$0xf]
      %v2020 = vld [vmem:[%s1974 + $0xb4] sm:$0xf]
      %v2021 = vld [vmem:[%s1974 + $0xb8] sm:$0xf]
      %v2022 = vld [vmem:[%s1974 + $0xbc] sm:$0xf]
      %s2023 = scalar_lea.vmem %s5, 3
      %v2024 = vld [vmem:[%s2023] sm:$0x1]
      %v2026 = vlaneseq
      %v2027 = vshrl.u32 %v2026, 7
      %v2028 = vsub.s32 0, %v2027
      %v2029 = vrot.slane %v2024, %v2028
      %v2079 = vunpack.c.l.b16 %v1975
      %v2080 = vunpack.c.l.b16 %v1976
      %v2081 = vunpack.c.l.b16 %v1977
      %v2082 = vunpack.c.l.b16 %v1978
      %v2083 = vunpack.c.l.b16 %v1979
      %v2084 = vunpack.c.l.b16 %v1980
      %v2085 = vunpack.c.l.b16 %v1981
      %v2086 = vunpack.c.l.b16 %v1982
      %v2087 = vunpack.c.l.b16 %v1983
      %v2088 = vunpack.c.l.b16 %v1984
      %v2089 = vunpack.c.l.b16 %v1985
      %v2090 = vunpack.c.l.b16 %v1986
      %v2091 = vunpack.c.l.b16 %v1987
      %v2092 = vunpack.c.l.b16 %v1988
      %v2093 = vunpack.c.l.b16 %v1989
      %v2094 = vunpack.c.l.b16 %v1990
      %v2095 = vunpack.c.l.b16 %v1991
      %v2096 = vunpack.c.l.b16 %v1992
      %v2097 = vunpack.c.l.b16 %v1993
      %v2098 = vunpack.c.l.b16 %v1994
      %v2099 = vunpack.c.l.b16 %v1995
      %v2100 = vunpack.c.l.b16 %v1996
      %v2101 = vunpack.c.l.b16 %v1997
      %v2102 = vunpack.c.l.b16 %v1998
      %v2103 = vunpack.c.l.b16 %v1999
      %v2104 = vunpack.c.l.b16 %v2000
      %v2105 = vunpack.c.l.b16 %v2001
      %v2106 = vunpack.c.l.b16 %v2002
      %v2107 = vunpack.c.l.b16 %v2003
      %v2108 = vunpack.c.l.b16 %v2004
      %v2109 = vunpack.c.l.b16 %v2005
      %v2110 = vunpack.c.l.b16 %v2006
      %v2111 = vunpack.c.l.b16 %v2007
      %v2112 = vunpack.c.l.b16 %v2008
      %v2113 = vunpack.c.l.b16 %v2009
      %v2114 = vunpack.c.l.b16 %v2010
      %v2115 = vunpack.c.l.b16 %v2011
      %v2116 = vunpack.c.l.b16 %v2012
      %v2117 = vunpack.c.l.b16 %v2013
      %v2118 = vunpack.c.l.b16 %v2014
      %v2119 = vunpack.c.l.b16 %v2015
      %v2120 = vunpack.c.l.b16 %v2016
      %v2121 = vunpack.c.l.b16 %v2017
      %v2122 = vunpack.c.l.b16 %v2018
      %v2123 = vunpack.c.l.b16 %v2019
      %v2124 = vunpack.c.l.b16 %v2020
      %v2125 = vunpack.c.l.b16 %v2021
      %v2126 = vunpack.c.l.b16 %v2022
      %v2127 = vpack.c.b16 %v2080, %v2079
      %v2128 = vpack.c.b16 %v2082, %v2081
      %v2129 = vpack.c.b16 %v2084, %v2083
      %v2130 = vpack.c.b16 %v2086, %v2085
      %v2131 = vpack.c.b16 %v2088, %v2087
      %v2132 = vpack.c.b16 %v2090, %v2089
      %v2133 = vpack.c.b16 %v2092, %v2091
      %v2134 = vpack.c.b16 %v2094, %v2093
      %v2135 = vpack.c.b16 %v2096, %v2095
      %v2136 = vpack.c.b16 %v2098, %v2097
      %v2137 = vpack.c.b16 %v2100, %v2099
      %v2138 = vpack.c.b16 %v2102, %v2101
      %v2139 = vpack.c.b16 %v2104, %v2103
      %v2140 = vpack.c.b16 %v2106, %v2105
      %v2141 = vpack.c.b16 %v2108, %v2107
      %v2142 = vpack.c.b16 %v2110, %v2109
      %v2143 = vpack.c.b16 %v2112, %v2111
      %v2144 = vpack.c.b16 %v2114, %v2113
      %v2145 = vpack.c.b16 %v2116, %v2115
      %v2146 = vpack.c.b16 %v2118, %v2117
      %v2147 = vpack.c.b16 %v2120, %v2119
      %v2148 = vpack.c.b16 %v2122, %v2121
      %v2149 = vpack.c.b16 %v2124, %v2123
      %v2150 = vpack.c.b16 %v2126, %v2125
      %2175 = vmatprep.subr.bf16.mxu0 0
      %2176 = vmatpush1.bf16.msra.mxu0 %v2127
      %2177 = vmatprep.subr.bf16.mxu0 0
      %2178 = vmatpush1.bf16.msra.mxu0 %v2128
      %2179 = vmatprep.subr.bf16.mxu0 0
      %2180 = vmatpush1.bf16.msra.mxu0 %v2129
      %2181 = vmatprep.subr.bf16.mxu0 0
      %2182 = vmatpush1.bf16.msra.mxu0 %v2130
      %2183 = vmatprep.subr.bf16.mxu0 0
      %2184 = vmatpush1.bf16.msra.mxu0 %v2131
      %2185 = vmatprep.subr.bf16.mxu0 0
      %2186 = vmatpush1.bf16.msra.mxu0 %v2132
      %2187 = vmatprep.subr.bf16.mxu0 0
      %2188 = vmatpush1.bf16.msra.mxu0 %v2133
      %2189 = vmatprep.subr.bf16.mxu0 0
      %2190 = vmatpush1.bf16.msra.mxu0 %v2134
      %2191 = vmatprep.subr.bf16.mxu0 0
      %2192 = vmatpush1.bf16.msra.mxu0 %v2135
      %2193 = vmatprep.subr.bf16.mxu0 0
      %2194 = vmatpush1.bf16.msra.mxu0 %v2136
      %2195 = vmatprep.subr.bf16.mxu0 0
      %2196 = vmatpush1.bf16.msra.mxu0 %v2137
      %2197 = vmatprep.subr.bf16.mxu0 0
      %2198 = vmatpush1.bf16.msra.mxu0 %v2138
      %2199 = vmatprep.subr.bf16.mxu0 0
      %2200 = vmatpush1.bf16.msra.mxu0 %v2139
      %2201 = vmatprep.subr.bf16.mxu0 0
      %2202 = vmatpush1.bf16.msra.mxu0 %v2140
      %2203 = vmatprep.subr.bf16.mxu0 0
      %2204 = vmatpush1.bf16.msra.mxu0 %v2141
      %2205 = vmatprep.subr.bf16.mxu0 0
      %2206 = vmatpush1.bf16.msra.mxu0 %v2142
      %2207 = vmatprep.mubr.bf16.mxu0 %v1972
      %2208 = vmatmul.mubr.bf16.gmra.mrb[0].mxu0 %v1971
      %v2209 = vpop.f32.mrb[0].mxu0
      %v2210 = vadd.f32 %v2029, %v2209
      %v2211 = vpop.f32.mrb[0].mxu0
      %v2212 = vpop.f32.mrb[0].mxu0
      %v2213 = vadd.f32 %v2029, %v2212
      %v2214 = vpop.f32.mrb[0].mxu0
      %2215 = vdwg.mxu0
      %2216 = vmatprep.subr.bf16.mxu0 0
      %2217 = vmatpush1.bf16.msra.mxu0 %v2143
      %2218 = vmatprep.subr.bf16.mxu0 0
      %2219 = vmatpush1.bf16.msra.mxu0 %v2144
      %2220 = vmatprep.subr.bf16.mxu0 0
      %2221 = vmatpush1.bf16.msra.mxu0 %v2145
      %2222 = vmatprep.subr.bf16.mxu0 0
      %2223 = vmatpush1.bf16.msra.mxu0 %v2146
      %2224 = vmatprep.subr.bf16.mxu0 0
      %2225 = vmatpush1.bf16.msra.mxu0 %v2147
      %2226 = vmatprep.subr.bf16.mxu0 0
      %2227 = vmatpush1.bf16.msra.mxu0 %v2148
      %2228 = vmatprep.subr.bf16.mxu0 0
      %2229 = vmatpush1.bf16.msra.mxu0 %v2149
      %2230 = vmatprep.subr.bf16.mxu0 0
      %2231 = vmatpush1.bf16.msra.mxu0 %v2150
      %2232 = vmatprep.subr.bf16.mxu0 0
      %2233 = vmatpush1.bf16.msra.mxu0 0
      %2234 = vmatprep.subr.bf16.mxu0 0
      %2235 = vmatpush1.bf16.msra.mxu0 0
      %2236 = vmatprep.subr.bf16.mxu0 0
      %2237 = vmatpush1.bf16.msra.mxu0 0
      %2238 = vmatprep.subr.bf16.mxu0 0
      %2239 = vmatpush1.bf16.msra.mxu0 0
      %2240 = vmatprep.subr.bf16.mxu0 0
      %2241 = vmatpush1.bf16.msra.mxu0 0
      %2242 = vmatprep.subr.bf16.mxu0 0
      %2243 = vmatpush1.bf16.msra.mxu0 0
      %2244 = vmatprep.subr.bf16.mxu0 0
      %2245 = vmatpush1.bf16.msra.mxu0 0
      %2246 = vmatprep.subr.bf16.mxu0 0
      %2247 = vmatpush1.bf16.msra.mxu0 0
      %2248 = vmatprep.mubr.bf16.mxu0 0
      %2249 = vmatmul.mubr.bf16.gmra.mrb[0].mxu0 %v1973
      %v2250 = vpop.f32.mrb[0].mxu0
      %v2251 = vadd.f32 %v2210, %v2250
      %v2252 = vpop.f32.mrb[0].mxu0
      %v2253 = vpop.f32.mrb[0].mxu0
      %v2254 = vadd.f32 %v2213, %v2253
      %v2255 = vpop.f32.mrb[0].mxu0
      %2256 = vdwg.mxu0
      %v2257 = vadd.f32 %v2251, %v1429
      %v2258 = vadd.f32 %v2254, %v1430
      %v2259 = vmax.f32 %v2257, 0.0
      %v2260 = vmax.f32 %v2258, 0.0
      %v2261 = vpack.c.bf16 %v1845, %v1844
      %s2262 = scalar_lea.vmem %s6, 64
      %v2263 = vld [vmem:[%s2262] sm:$0xf]
      %v2264 = vld [vmem:[%s2262 + $0x4] sm:$0xf]
      %v2265 = vld [vmem:[%s2262 + $0x8] sm:$0xf]
      %v2266 = vld [vmem:[%s2262 + $0xc] sm:$0xf]
      %v2267 = vld [vmem:[%s2262 + $0x10] sm:$0xf]
      %v2268 = vld [vmem:[%s2262 + $0x14] sm:$0xf]
      %v2269 = vld [vmem:[%s2262 + $0x18] sm:$0xf]
      %v2270 = vld [vmem:[%s2262 + $0x1c] sm:$0xf]
      %v2271 = vld [vmem:[%s2262 + $0x20] sm:$0xf]
      %v2272 = vld [vmem:[%s2262 + $0x24] sm:$0xf]
      %v2273 = vld [vmem:[%s2262 + $0x28] sm:$0xf]
      %v2274 = vld [vmem:[%s2262 + $0x2c] sm:$0xf]
      %v2275 = vld [vmem:[%s2262 + $0x30] sm:$0xf]
      %v2276 = vld [vmem:[%s2262 + $0x34] sm:$0xf]
      %v2277 = vld [vmem:[%s2262 + $0x38] sm:$0xf]
      %v2278 = vld [vmem:[%s2262 + $0x3c] sm:$0xf]
      %s2279 = scalar_lea.vmem %s7, 1
      %v2280 = vld [vmem:[%s2279] sm:$0x1]
      %v2282 = vlaneseq
      %v2283 = vshrl.u32 %v2282, 7
      %v2284 = vsub.s32 0, %v2283
      %v2285 = vrot.slane %v2280, %v2284
      %v2303 = vunpack.c.l.b16 %v2263
      %v2304 = vunpack.c.l.b16 %v2264
      %v2305 = vunpack.c.l.b16 %v2265
      %v2306 = vunpack.c.l.b16 %v2266
      %v2307 = vunpack.c.l.b16 %v2267
      %v2308 = vunpack.c.l.b16 %v2268
      %v2309 = vunpack.c.l.b16 %v2269
      %v2310 = vunpack.c.l.b16 %v2270
      %v2311 = vunpack.c.l.b16 %v2271
      %v2312 = vunpack.c.l.b16 %v2272
      %v2313 = vunpack.c.l.b16 %v2273
      %v2314 = vunpack.c.l.b16 %v2274
      %v2315 = vunpack.c.l.b16 %v2275
      %v2316 = vunpack.c.l.b16 %v2276
      %v2317 = vunpack.c.l.b16 %v2277
      %v2318 = vunpack.c.l.b16 %v2278
      %v2319 = vpack.c.b16 %v2304, %v2303
      %v2320 = vpack.c.b16 %v2306, %v2305
      %v2321 = vpack.c.b16 %v2308, %v2307
      %v2322 = vpack.c.b16 %v2310, %v2309
      %v2323 = vpack.c.b16 %v2312, %v2311
      %v2324 = vpack.c.b16 %v2314, %v2313
      %v2325 = vpack.c.b16 %v2316, %v2315
      %v2326 = vpack.c.b16 %v2318, %v2317
      %2335 = vmatprep.subr.bf16.mxu0 0
      %2336 = vmatpush1.bf16.msra.mxu0 %v2319
      %2337 = vmatprep.subr.bf16.mxu0 0
      %2338 = vmatpush1.bf16.msra.mxu0 %v2320
      %2339 = vmatprep.subr.bf16.mxu0 0
      %2340 = vmatpush1.bf16.msra.mxu0 %v2321
      %2341 = vmatprep.subr.bf16.mxu0 0
      %2342 = vmatpush1.bf16.msra.mxu0 %v2322
      %2343 = vmatprep.subr.bf16.mxu0 0
      %2344 = vmatpush1.bf16.msra.mxu0 %v2323
      %2345 = vmatprep.subr.bf16.mxu0 0
      %2346 = vmatpush1.bf16.msra.mxu0 %v2324
      %2347 = vmatprep.subr.bf16.mxu0 0
      %2348 = vmatpush1.bf16.msra.mxu0 %v2325
      %2349 = vmatprep.subr.bf16.mxu0 0
      %2350 = vmatpush1.bf16.msra.mxu0 %v2326
      %2351 = vmatprep.subr.bf16.mxu0 0
      %2352 = vmatpush1.bf16.msra.mxu0 0
      %2353 = vmatprep.subr.bf16.mxu0 0
      %2354 = vmatpush1.bf16.msra.mxu0 0
      %2355 = vmatprep.subr.bf16.mxu0 0
      %2356 = vmatpush1.bf16.msra.mxu0 0
      %2357 = vmatprep.subr.bf16.mxu0 0
      %2358 = vmatpush1.bf16.msra.mxu0 0
      %2359 = vmatprep.subr.bf16.mxu0 0
      %2360 = vmatpush1.bf16.msra.mxu0 0
      %2361 = vmatprep.subr.bf16.mxu0 0
      %2362 = vmatpush1.bf16.msra.mxu0 0
      %2363 = vmatprep.subr.bf16.mxu0 0
      %2364 = vmatpush1.bf16.msra.mxu0 0
      %2365 = vmatprep.subr.bf16.mxu0 0
      %2366 = vmatpush1.bf16.msra.mxu0 0
      %2367 = vmatprep.mubr.bf16.mxu0 0
      %2368 = vmatmul.mubr.bf16.gmra.mrb[0].mxu0 %v2261
      %v2369 = vpop.f32.mrb[0].mxu0
      %v2370 = vadd.f32 %v2285, %v2369
      %v2371 = vpop.f32.mrb[0].mxu0
      %v2372 = vpop.f32.mrb[0].mxu0
      %v2373 = vadd.f32 %v2285, %v2372
      %v2374 = vpop.f32.mrb[0].mxu0
      %2375 = vdwg.mxu0
      %v2376 = vpack.c.bf16 %v2260, %v2259
      %s2377 = scalar_lea.vmem %s6, 192
      %v2378 = vld [vmem:[%s2377] sm:$0xf]
      %v2379 = vld [vmem:[%s2377 + $0x4] sm:$0xf]
      %v2380 = vld [vmem:[%s2377 + $0x8] sm:$0xf]
      %v2381 = vld [vmem:[%s2377 + $0xc] sm:$0xf]
      %v2382 = vld [vmem:[%s2377 + $0x10] sm:$0xf]
      %v2383 = vld [vmem:[%s2377 + $0x14] sm:$0xf]
      %v2384 = vld [vmem:[%s2377 + $0x18] sm:$0xf]
      %v2385 = vld [vmem:[%s2377 + $0x1c] sm:$0xf]
      %v2386 = vld [vmem:[%s2377 + $0x20] sm:$0xf]
      %v2387 = vld [vmem:[%s2377 + $0x24] sm:$0xf]
      %v2388 = vld [vmem:[%s2377 + $0x28] sm:$0xf]
      %v2389 = vld [vmem:[%s2377 + $0x2c] sm:$0xf]
      %v2390 = vld [vmem:[%s2377 + $0x30] sm:$0xf]
      %v2391 = vld [vmem:[%s2377 + $0x34] sm:$0xf]
      %v2392 = vld [vmem:[%s2377 + $0x38] sm:$0xf]
      %v2393 = vld [vmem:[%s2377 + $0x3c] sm:$0xf]
      %s2394 = scalar_lea.vmem %s7, 3
      %v2395 = vld [vmem:[%s2394] sm:$0x1]
      %v2397 = vlaneseq
      %v2398 = vshrl.u32 %v2397, 7
      %v2399 = vsub.s32 0, %v2398
      %v2400 = vrot.slane %v2395, %v2399
      %v2418 = vunpack.c.l.b16 %v2378
      %v2419 = vunpack.c.l.b16 %v2379
      %v2420 = vunpack.c.l.b16 %v2380
      %v2421 = vunpack.c.l.b16 %v2381
      %v2422 = vunpack.c.l.b16 %v2382
      %v2423 = vunpack.c.l.b16 %v2383
      %v2424 = vunpack.c.l.b16 %v2384
      %v2425 = vunpack.c.l.b16 %v2385
      %v2426 = vunpack.c.l.b16 %v2386
      %v2427 = vunpack.c.l.b16 %v2387
      %v2428 = vunpack.c.l.b16 %v2388
      %v2429 = vunpack.c.l.b16 %v2389
      %v2430 = vunpack.c.l.b16 %v2390
      %v2431 = vunpack.c.l.b16 %v2391
      %v2432 = vunpack.c.l.b16 %v2392
      %v2433 = vunpack.c.l.b16 %v2393
      %v2434 = vpack.c.b16 %v2419, %v2418
      %v2435 = vpack.c.b16 %v2421, %v2420
      %v2436 = vpack.c.b16 %v2423, %v2422
      %v2437 = vpack.c.b16 %v2425, %v2424
      %v2438 = vpack.c.b16 %v2427, %v2426
      %v2439 = vpack.c.b16 %v2429, %v2428
      %v2440 = vpack.c.b16 %v2431, %v2430
      %v2441 = vpack.c.b16 %v2433, %v2432
      %2450 = vmatprep.subr.bf16.mxu0 0
      %2451 = vmatpush1.bf16.msra.mxu0 %v2434
      %2452 = vmatprep.subr.bf16.mxu0 0
      %2453 = vmatpush1.bf16.msra.mxu0 %v2435
      %2454 = vmatprep.subr.bf16.mxu0 0
      %2455 = vmatpush1.bf16.msra.mxu0 %v2436
      %2456 = vmatprep.subr.bf16.mxu0 0
      %2457 = vmatpush1.bf16.msra.mxu0 %v2437
      %2458 = vmatprep.subr.bf16.mxu0 0
      %2459 = vmatpush1.bf16.msra.mxu0 %v2438
      %2460 = vmatprep.subr.bf16.mxu0 0
      %2461 = vmatpush1.bf16.msra.mxu0 %v2439
      %2462 = vmatprep.subr.bf16.mxu0 0
      %2463 = vmatpush1.bf16.msra.mxu0 %v2440
      %2464 = vmatprep.subr.bf16.mxu0 0
      %2465 = vmatpush1.bf16.msra.mxu0 %v2441
      %2466 = vmatprep.subr.bf16.mxu0 0
      %2467 = vmatpush1.bf16.msra.mxu0 0
      %2468 = vmatprep.subr.bf16.mxu0 0
      %2469 = vmatpush1.bf16.msra.mxu0 0
      %2470 = vmatprep.subr.bf16.mxu0 0
      %2471 = vmatpush1.bf16.msra.mxu0 0
      %2472 = vmatprep.subr.bf16.mxu0 0
      %2473 = vmatpush1.bf16.msra.mxu0 0
      %2474 = vmatprep.subr.bf16.mxu0 0
      %2475 = vmatpush1.bf16.msra.mxu0 0
      %2476 = vmatprep.subr.bf16.mxu0 0
      %2477 = vmatpush1.bf16.msra.mxu0 0
      %2478 = vmatprep.subr.bf16.mxu0 0
      %2479 = vmatpush1.bf16.msra.mxu0 0
      %2480 = vmatprep.subr.bf16.mxu0 0
      %2481 = vmatpush1.bf16.msra.mxu0 0
      %2482 = vmatprep.mubr.bf16.mxu0 0
      %2483 = vmatmul.mubr.bf16.gmra.mrb[0].mxu0 %v2376
      %v2484 = vpop.f32.mrb[0].mxu0
      %v2485 = vadd.f32 %v2400, %v2484
      %v2486 = vpop.f32.mrb[0].mxu0
      %v2487 = vpop.f32.mrb[0].mxu0
      %v2488 = vadd.f32 %v2400, %v2487
      %v2489 = vpop.f32.mrb[0].mxu0
      %2490 = vdwg.mxu0
      %v2491 = vadd.f32 %v1844, %v2485
      %v2492 = vadd.f32 %v1845, %v2488
      %v2493 = vadd.f32 %v2259, %v2370
      %v2494 = vadd.f32 %v2260, %v2373
      %2495 = vst [vmem:[%s360] sm:$0xff] %v2491
      %2496 = vst [vmem:[%s360 + $0x8] sm:$0xff] %v2492
      %2497 = vst [vmem:[%s365] sm:$0xff] %v2493
      %2498 = vst [vmem:[%s365 + $0x8] sm:$0xff] %v2494
      %p2499 = scmp.lt.s32.totalorder %s21, 1
      %s2500 = scalar_select %p2499, %s21, 1
      %s2501 = smul.addr %s2500, 2
      %s2502 = smul.addr %s2501, 8
      %s2503 = scalar_lea.vmem %s8, %s2502
      %p2504 = scmp.lt.s32.totalorder %s21, 1
      %s2505 = scalar_select %p2504, %s21, 1
      %s2506 = smul.addr %s2505, 2
      %s2507 = smul.addr %s2506, 8
      %s2508 = scalar_lea.vmem %s9, %s2507
      // Predicated region
      $region53: #{combine_rev_forward.1} parent=51 // pred_check
        %p2509 = pneg %p217
      $region54: #{combine_rev_forward.1} parent=51 // pred_check_branch
        %2511 = sbr.rel (%p2509) target = $region56
      $region55: #{combine_rev_forward.1} parent=51 // pred_region
        _
      $region56: #{combine_rev_forward.1} parent=51 // pred_fallthru
        _
      // Predicated region
      $region57: #{combine_rev_forward.1} parent=51 // pred_check
        %p2512 = pneg %p243
      $region58: #{combine_rev_forward.1} parent=51 // pred_check_branch
        %2514 = sbr.rel (%p2512) target = $region60
      $region59: #{combine_rev_forward.1} parent=51 // pred_region
        _
      $region60: #{combine_rev_forward.1} parent=51 // pred_fallthru
        _
    $region52: #{combine_rev_forward.1} parent=5 // pred_fallthru
      _
    %p2515 = scmp.le.s32.totalorder 2, %s16
    // Predicated region
    $region61: #{combine_rev_forward.1} parent=5 // pred_check
      %p2516 = pneg %p2515
    $region62: #{combine_rev_forward.1} parent=5 // pred_check_branch
      %2518 = sbr.rel (%p2516) target = $region64
    $region63: #{combine_rev_forward.1} parent=5 // pred_region
      %s2519 = ssub.s32 %s16, 2
      // Predicated region
      $region65: #{combine_rev_forward.1} parent=63 // pred_check
        %p2520 = pneg %p223
      $region66: #{combine_rev_forward.1} parent=63 // pred_check_branch
        %2522 = sbr.rel (%p2520) target = $region68
      $region67: #{combine_rev_forward.1} parent=63 // pred_region
        %p2523 = scmp.lt.s32.totalorder %s22, 1
        %s2524 = scalar_select %p2523, %s22, 1
        %s2525 = smul.addr %s2524, 2
        %s2526 = smul.addr %s2525, 8
        %s2527 = scalar_lea.vmem %s8, %s2526
      $region68: #{combine_rev_forward.1} parent=63 // pred_fallthru
        _
      // Predicated region
      $region69: #{combine_rev_forward.1} parent=63 // pred_check
        %p2528 = pneg %p249
      $region70: #{combine_rev_forward.1} parent=63 // pred_check_branch
        %2530 = sbr.rel (%p2528) target = $region72
      $region71: #{combine_rev_forward.1} parent=63 // pred_region
        %p2531 = scmp.lt.s32.totalorder %s22, 1
        %s2532 = scalar_select %p2531, %s22, 1
        %s2533 = smul.addr %s2532, 2
        %s2534 = smul.addr %s2533, 8
        %s2535 = scalar_lea.vmem %s9, %s2534
      $region72: #{combine_rev_forward.1} parent=63 // pred_fallthru
        _
    $region64: #{combine_rev_forward.1} parent=5 // pred_fallthru
      _
  $region6: #{combine_rev_forward.1} parent=0 // loop_footer
    %s20 = sadd.s32 1, %s16
  $region7: #{combine_rev_forward.1} parent=0 // loop_footer_branch
    %15 = sbr.rel target = $region3
  $region8: #{combine_rev_forward.1} parent=0 // loop_exit
    _

</llo_original>
